<compile_context>
chip_gen: v7x
topology: tpu7x:2x2x1
jax: 0.10.0
libtpu: 0.0.40
codegen_flags: <defaults>
</compile_context>

<pallas_src>
import jax
import jax.numpy as jnp
from jax import lax
from jax.experimental import pallas as pl

NUM_HEADS = 4


def attn_block_kernel(x_ref, wf_ref, bf_ref, wo_ref, bo_ref, o_ref):
    # x_ref : (B, C, S)  whole batch, original NCL layout (no wrapper transposes)
    # wf_ref: (3C, C)    fused (in_proj o to_qkv) weight, 1/sqrt(hd) folded into the Q rows
    # bf_ref: (3C, 1)    fused bias
    # wo_ref: (C, C)     MHA out_proj weight (used untransposed: out^T = Wo @ attn^T)
    # bo_ref: (C, 1)     out_proj bias
    # o_ref : (B, C, S)
    B, C, S = x_ref.shape
    H = NUM_HEADS
    hd = C // H

    # Lane-concat the per-batch slabs -> (C, B*S): both big matmuls run at B*S lane width.
    x_slab = jnp.concatenate([x_ref[b] for b in range(B)], axis=-1)            # (C, B*S)

    # Single fused projection producing q^T, k^T, v^T stacked along sublanes.
    y = jnp.dot(wf_ref[...], x_slab, preferred_element_type=jnp.float32) + bf_ref[...]
    qT = y[0 * C:1 * C, :]                                                      # (C, B*S)
    kT = y[1 * C:2 * C, :]
    vT = y[2 * C:3 * C, :]

    # One transpose per call so every score matmul is a plain (S,hd)@(hd,S).
    q_s = qT.T                                                                  # (B*S, C)

    # All B*H score matmuls first, then ONE batched softmax over the stacked slab.
    score_tiles = []
    for b in range(B):
        for h in range(H):
            qh = q_s[b * S:(b + 1) * S, h * hd:(h + 1) * hd]                    # (S, hd)
            khT = kT[h * hd:(h + 1) * hd, b * S:(b + 1) * S]                    # (hd, S)
            score_tiles.append(
                jnp.dot(qh, khT, preferred_element_type=jnp.float32))           # (S, S)
    s_all = jnp.concatenate(score_tiles, axis=0)                                # (B*H*S, S)
    s_all = s_all - jnp.max(s_all, axis=-1, keepdims=True)
    p_all = jnp.exp(s_all)
    denom = jnp.sum(p_all, axis=-1, keepdims=True)
    p_all = p_all * pl.reciprocal(denom, approx=True)                           # EUP, not VALU

    # Per-(batch, head) PV matmuls: attn^T = v^T @ p^T  (A @ B^T, no explicit transpose).
    attn_cols = []
    for b in range(B):
        head_outs = []
        for h in range(H):
            idx = b * H + h
            p = p_all[idx * S:(idx + 1) * S, :]                                 # (S, S)
            vhT = vT[h * hd:(h + 1) * hd, b * S:(b + 1) * S]                    # (hd, S)
            head_outs.append(
                lax.dot_general(vhT, p, (((1,), (1,)), ((), ())),
                                preferred_element_type=jnp.float32))            # (hd, S)
        # Heads concatenated along the sublane axis (8-row aligned, cheap).
        attn_cols.append(jnp.concatenate(head_outs, axis=0))                    # (C, S)
    attnT = jnp.concatenate(attn_cols, axis=-1)                                 # (C, B*S)

    # One out_proj matmul over the full (C, B*S) slab, then per-batch store in NCL layout.
    outT = jnp.dot(wo_ref[...], attnT, preferred_element_type=jnp.float32) + bo_ref[...]
    for b in range(B):
        o_ref[b] = outT[:, b * S:(b + 1) * S].astype(o_ref.dtype)


def fuse_params(params):
    """One-time preprocessing (outside the per-forward path): fold to_qkv into the MHA
    in_proj and fold the 1/sqrt(head_dim) scale into the fused Q weight/bias."""
    C = params["out_proj_w"].shape[0]
    hd = C // NUM_HEADS
    scale = 1.0 / float(hd) ** 0.5
    wt, bt = params["to_qkv_w"], params["to_qkv_b"]       # (3C, C), (3C,)
    wi, bi = params["in_proj_w"], params["in_proj_b"]     # (3C, C), (3C,)

    def fuse(lo, hi, s):
        w = s * (wi[lo:hi] @ wt[lo:hi])                   # (C, C): acts on x (C, S) from the left
        b = s * (wi[lo:hi] @ bt[lo:hi] + bi[lo:hi])       # (C,)
        return w, b

    wq, bq = fuse(0, C, scale)
    wk, bk = fuse(C, 2 * C, 1.0)
    wv, bv = fuse(2 * C, 3 * C, 1.0)
    return {
        "w_fused": jnp.concatenate([wq, wk, wv], axis=0),            # (3C, C)
        "b_fused": jnp.concatenate([bq, bk, bv], axis=0)[:, None],   # (3C, 1)
        "out_proj_w": params["out_proj_w"],                          # (C, C), untransposed
        "out_proj_b": params["out_proj_b"][:, None],                 # (C, 1)
    }


def attention_block(x, fused):
    """x: (B, in_ch, seq) float32 -> (B, in_ch, seq). `fused` comes from fuse_params().

    Single pallas_call, no grid: the whole problem (<100 KiB) lives in VMEM and runs as
    one step on one TensorCore, which is the right regime for these tiny shapes."""
    B, C, S = x.shape
    return pl.pallas_call(
        attn_block_kernel,
        out_shape=jax.ShapeDtypeStruct((B, C, S), x.dtype),
    )(x, fused["w_fused"], fused["b_fused"], fused["out_proj_w"], fused["out_proj_b"])


def reference_attention_block(x, params):
    """Pure-JAX reference mirroring the PyTorch forward exactly (unfused)."""
    B, C, S = x.shape
    hd = C // NUM_HEADS
    xt = jnp.transpose(x, (0, 2, 1))                                # (B, S, C)
    qkv = xt @ params["to_qkv_w"].T + params["to_qkv_b"]            # (B, S, 3C)
    q, k, v = qkv[..., :C], qkv[..., C:2 * C], qkv[..., 2 * C:]
    wi, bi = params["in_proj_w"], params["in_proj_b"]
    qp = q @ wi[:C].T + bi[:C]
    kp = k @ wi[C:2 * C].T + bi[C:2 * C]
    vp = v @ wi[2 * C:].T + bi[2 * C:]

    def split(t):  # (B, S, C) -> (B, H, S, hd)
        return jnp.transpose(t.reshape(B, S, NUM_HEADS, hd), (0, 2, 1, 3))

    qh, kh, vh = split(qp), split(kp), split(vp)
    scores = jnp.einsum("bhqd,bhkd->bhqk", qh, kh) / jnp.sqrt(jnp.float32(hd))
    probs = jax.nn.softmax(scores, axis=-1)
    o = jnp.einsum("bhqk,bhkd->bhqd", probs, vh)
    o = jnp.transpose(o, (0, 2, 1, 3)).reshape(B, S, C)
    o = o @ params["out_proj_w"].T + params["out_proj_b"]
    return jnp.transpose(o, (0, 2, 1))


def init_params(key, in_features):
    C = in_features
    ks = jax.random.split(key, 6)
    scale = 0.05
    return {
        "to_qkv_w": scale * jax.random.normal(ks[0], (3 * C, C), jnp.float32),
        "to_qkv_b": scale * jax.random.normal(ks[1], (3 * C,), jnp.float32),
        "in_proj_w": scale * jax.random.normal(ks[2], (3 * C, C), jnp.float32),
        "in_proj_b": scale * jax.random.normal(ks[3], (3 * C,), jnp.float32),
        "out_proj_w": scale * jax.random.normal(ks[4], (C, C), jnp.float32),
        "out_proj_b": scale * jax.random.normal(ks[5], (C,), jnp.float32),
    }


if __name__ == "__main__":
    B, in_ch, seq = 2, 32, 16          # in_ch must be divisible by num_heads=4
    key = jax.random.PRNGKey(0)
    kx, kp = jax.random.split(key)
    x = jax.random.normal(kx, (B, in_ch, seq), jnp.float32)
    params = init_params(kp, in_ch)

    fused = fuse_params(params)        # one-time weight fusion / reshaping
    out = attention_block(x, fused)
    out = jax.block_until_ready(out)

    ref = reference_attention_block(x, params)
    assert out.shape == (B, in_ch, seq)
    # Slightly looser tolerance than f32 exact: approx-reciprocal softmax + fused weights.
    assert jnp.allclose(out, ref, atol=5e-4, rtol=5e-4), "mismatch vs reference"

    print("KERNEL_OK")
</pallas_src>

<mosaic_0001>
module attributes {stable_mosaic.version = 11 : i64} {
  func.func @attn_block_kernel(%arg0: memref<2x32x16xf32, #tpu.memory_space<vmem>>, %arg1: memref<96x32xf32, #tpu.memory_space<vmem>>, %arg2: memref<96x1xf32, #tpu.memory_space<vmem>>, %arg3: memref<32x32xf32, #tpu.memory_space<vmem>>, %arg4: memref<32x1xf32, #tpu.memory_space<vmem>>, %arg5: memref<2x32x16xf32, #tpu.memory_space<vmem>>) attributes {dimension_semantics = [], scalar_prefetch = 0 : i64, scratch_operands = 0 : i64, tpu.core_type = #tpu.core_type<tc>} {
    %c0 = arith.constant 0 : index
    %c0_0 = arith.constant 0 : index
    %c0_1 = arith.constant 0 : index
    %0 = vector.load %arg0[%c0, %c0_0, %c0_1] : memref<2x32x16xf32, #tpu.memory_space<vmem>>, vector<1x32x16xf32>
    %1 = vector.shape_cast %0 : vector<1x32x16xf32> to vector<32x16xf32>
    %c1 = arith.constant 1 : index
    %c0_2 = arith.constant 0 : index
    %c0_3 = arith.constant 0 : index
    %2 = vector.load %arg0[%c1, %c0_2, %c0_3] : memref<2x32x16xf32, #tpu.memory_space<vmem>>, vector<1x32x16xf32>
    %3 = vector.shape_cast %2 : vector<1x32x16xf32> to vector<32x16xf32>
    %4 = tpu.concatenate %1, %3 in 1 : vector<32x16xf32>, vector<32x16xf32> -> vector<32x32xf32>
    %c0_4 = arith.constant 0 : index
    %c0_5 = arith.constant 0 : index
    %5 = vector.load %arg1[%c0_4, %c0_5] : memref<96x32xf32, #tpu.memory_space<vmem>>, vector<96x32xf32>
    %cst = arith.constant dense<0.000000e+00> : vector<96x32xf32>
    %6 = tpu.matmul %5, %4, %cst {dimension_numbers = #tpu.dot_dimension_numbers<[1], [0], [0], [1], [0, 0, 1, 1], [], []>} : vector<96x32xf32>, vector<32x32xf32>, vector<96x32xf32> -> vector<96x32xf32>
    %c0_6 = arith.constant 0 : index
    %c0_7 = arith.constant 0 : index
    %7 = vector.load %arg2[%c0_6, %c0_7] : memref<96x1xf32, #tpu.memory_space<vmem>>, vector<96x1xf32>
    %8 = vector.broadcast %7 : vector<96x1xf32> to vector<96x32xf32>
    %9 = arith.addf %6, %8 : vector<96x32xf32>
    %10 = vector.extract_strided_slice %9 {offsets = [0, 0], sizes = [32, 32], strides = [1, 1]} : vector<96x32xf32> to vector<32x32xf32>
    %11 = vector.extract_strided_slice %9 {offsets = [32, 0], sizes = [32, 32], strides = [1, 1]} : vector<96x32xf32> to vector<32x32xf32>
    %12 = vector.extract_strided_slice %9 {offsets = [64, 0], sizes = [32, 32], strides = [1, 1]} : vector<96x32xf32> to vector<32x32xf32>
    %13 = tpu.transpose %10, [1, 0] : vector<32x32xf32> -> vector<32x32xf32>
    %14 = vector.extract_strided_slice %13 {offsets = [0, 0], sizes = [16, 8], strides = [1, 1]} : vector<32x32xf32> to vector<16x8xf32>
    %15 = vector.extract_strided_slice %11 {offsets = [0, 0], sizes = [8, 16], strides = [1, 1]} : vector<32x32xf32> to vector<8x16xf32>
    %cst_8 = arith.constant dense<0.000000e+00> : vector<16x16xf32>
    %16 = tpu.matmul %14, %15, %cst_8 {dimension_numbers = #tpu.dot_dimension_numbers<[1], [0], [0], [1], [0, 0, 1, 1], [], []>} : vector<16x8xf32>, vector<8x16xf32>, vector<16x16xf32> -> vector<16x16xf32>
    %17 = vector.extract_strided_slice %13 {offsets = [0, 8], sizes = [16, 8], strides = [1, 1]} : vector<32x32xf32> to vector<16x8xf32>
    %18 = vector.extract_strided_slice %11 {offsets = [8, 0], sizes = [8, 16], strides = [1, 1]} : vector<32x32xf32> to vector<8x16xf32>
    %cst_9 = arith.constant dense<0.000000e+00> : vector<16x16xf32>
    %19 = tpu.matmul %17, %18, %cst_9 {dimension_numbers = #tpu.dot_dimension_numbers<[1], [0], [0], [1], [0, 0, 1, 1], [], []>} : vector<16x8xf32>, vector<8x16xf32>, vector<16x16xf32> -> vector<16x16xf32>
    %20 = vector.extract_strided_slice %13 {offsets = [0, 16], sizes = [16, 8], strides = [1, 1]} : vector<32x32xf32> to vector<16x8xf32>
    %21 = vector.extract_strided_slice %11 {offsets = [16, 0], sizes = [8, 16], strides = [1, 1]} : vector<32x32xf32> to vector<8x16xf32>
    %cst_10 = arith.constant dense<0.000000e+00> : vector<16x16xf32>
    %22 = tpu.matmul %20, %21, %cst_10 {dimension_numbers = #tpu.dot_dimension_numbers<[1], [0], [0], [1], [0, 0, 1, 1], [], []>} : vector<16x8xf32>, vector<8x16xf32>, vector<16x16xf32> -> vector<16x16xf32>
    %23 = vector.extract_strided_slice %13 {offsets = [0, 24], sizes = [16, 8], strides = [1, 1]} : vector<32x32xf32> to vector<16x8xf32>
    %24 = vector.extract_strided_slice %11 {offsets = [24, 0], sizes = [8, 16], strides = [1, 1]} : vector<32x32xf32> to vector<8x16xf32>
    %cst_11 = arith.constant dense<0.000000e+00> : vector<16x16xf32>
    %25 = tpu.matmul %23, %24, %cst_11 {dimension_numbers = #tpu.dot_dimension_numbers<[1], [0], [0], [1], [0, 0, 1, 1], [], []>} : vector<16x8xf32>, vector<8x16xf32>, vector<16x16xf32> -> vector<16x16xf32>
    %26 = vector.extract_strided_slice %13 {offsets = [16, 0], sizes = [16, 8], strides = [1, 1]} : vector<32x32xf32> to vector<16x8xf32>
    %27 = vector.extract_strided_slice %11 {offsets = [0, 16], sizes = [8, 16], strides = [1, 1]} : vector<32x32xf32> to vector<8x16xf32>
    %cst_12 = arith.constant dense<0.000000e+00> : vector<16x16xf32>
    %28 = tpu.matmul %26, %27, %cst_12 {dimension_numbers = #tpu.dot_dimension_numbers<[1], [0], [0], [1], [0, 0, 1, 1], [], []>} : vector<16x8xf32>, vector<8x16xf32>, vector<16x16xf32> -> vector<16x16xf32>
    %29 = vector.extract_strided_slice %13 {offsets = [16, 8], sizes = [16, 8], strides = [1, 1]} : vector<32x32xf32> to vector<16x8xf32>
    %30 = vector.extract_strided_slice %11 {offsets = [8, 16], sizes = [8, 16], strides = [1, 1]} : vector<32x32xf32> to vector<8x16xf32>
    %cst_13 = arith.constant dense<0.000000e+00> : vector<16x16xf32>
    %31 = tpu.matmul %29, %30, %cst_13 {dimension_numbers = #tpu.dot_dimension_numbers<[1], [0], [0], [1], [0, 0, 1, 1], [], []>} : vector<16x8xf32>, vector<8x16xf32>, vector<16x16xf32> -> vector<16x16xf32>
    %32 = vector.extract_strided_slice %13 {offsets = [16, 16], sizes = [16, 8], strides = [1, 1]} : vector<32x32xf32> to vector<16x8xf32>
    %33 = vector.extract_strided_slice %11 {offsets = [16, 16], sizes = [8, 16], strides = [1, 1]} : vector<32x32xf32> to vector<8x16xf32>
    %cst_14 = arith.constant dense<0.000000e+00> : vector<16x16xf32>
    %34 = tpu.matmul %32, %33, %cst_14 {dimension_numbers = #tpu.dot_dimension_numbers<[1], [0], [0], [1], [0, 0, 1, 1], [], []>} : vector<16x8xf32>, vector<8x16xf32>, vector<16x16xf32> -> vector<16x16xf32>
    %35 = vector.extract_strided_slice %13 {offsets = [16, 24], sizes = [16, 8], strides = [1, 1]} : vector<32x32xf32> to vector<16x8xf32>
    %36 = vector.extract_strided_slice %11 {offsets = [24, 16], sizes = [8, 16], strides = [1, 1]} : vector<32x32xf32> to vector<8x16xf32>
    %cst_15 = arith.constant dense<0.000000e+00> : vector<16x16xf32>
    %37 = tpu.matmul %35, %36, %cst_15 {dimension_numbers = #tpu.dot_dimension_numbers<[1], [0], [0], [1], [0, 0, 1, 1], [], []>} : vector<16x8xf32>, vector<8x16xf32>, vector<16x16xf32> -> vector<16x16xf32>
    %38 = tpu.concatenate %16, %19, %22, %25, %28, %31, %34, %37 in 0 : vector<16x16xf32>, vector<16x16xf32>, vector<16x16xf32>, vector<16x16xf32>, vector<16x16xf32>, vector<16x16xf32>, vector<16x16xf32>, vector<16x16xf32> -> vector<128x16xf32>
    %cst_16 = arith.constant dense<0xFF800000> : vector<128xf32>
    %39 = vector.multi_reduction <maximumf>, %38, %cst_16 [1] : vector<128x16xf32> to vector<128xf32>
    %40 = vector.shape_cast %39 : vector<128xf32> to vector<128x1xf32>
    %41 = vector.broadcast %40 : vector<128x1xf32> to vector<128x16xf32>
    %42 = arith.subf %38, %41 : vector<128x16xf32>
    %43 = math.exp %42 : vector<128x16xf32>
    %cst_17 = arith.constant dense<0.000000e+00> : vector<128xf32>
    %44 = vector.multi_reduction <add>, %43, %cst_17 [1] : vector<128x16xf32> to vector<128xf32>
    %45 = vector.shape_cast %44 : vector<128xf32> to vector<128x1xf32>
    %46 = tpu.reciprocal %45 {approx = true} : vector<128x1xf32> -> vector<128x1xf32>
    %47 = vector.broadcast %46 : vector<128x1xf32> to vector<128x16xf32>
    %48 = arith.mulf %43, %47 : vector<128x16xf32>
    %49 = vector.extract_strided_slice %48 {offsets = [0, 0], sizes = [16, 16], strides = [1, 1]} : vector<128x16xf32> to vector<16x16xf32>
    %50 = vector.extract_strided_slice %12 {offsets = [0, 0], sizes = [8, 16], strides = [1, 1]} : vector<32x32xf32> to vector<8x16xf32>
    %cst_18 = arith.constant dense<0.000000e+00> : vector<8x16xf32>
    %51 = tpu.matmul %50, %49, %cst_18 {dimension_numbers = #tpu.dot_dimension_numbers<[1], [1], [0], [0], [0, 0, 1, 0], [], []>} : vector<8x16xf32>, vector<16x16xf32>, vector<8x16xf32> -> vector<8x16xf32>
    %52 = vector.extract_strided_slice %48 {offsets = [16, 0], sizes = [16, 16], strides = [1, 1]} : vector<128x16xf32> to vector<16x16xf32>
    %53 = vector.extract_strided_slice %12 {offsets = [8, 0], sizes = [8, 16], strides = [1, 1]} : vector<32x32xf32> to vector<8x16xf32>
    %cst_19 = arith.constant dense<0.000000e+00> : vector<8x16xf32>
    %54 = tpu.matmul %53, %52, %cst_19 {dimension_numbers = #tpu.dot_dimension_numbers<[1], [1], [0], [0], [0, 0, 1, 0], [], []>} : vector<8x16xf32>, vector<16x16xf32>, vector<8x16xf32> -> vector<8x16xf32>
    %55 = vector.extract_strided_slice %48 {offsets = [32, 0], sizes = [16, 16], strides = [1, 1]} : vector<128x16xf32> to vector<16x16xf32>
    %56 = vector.extract_strided_slice %12 {offsets = [16, 0], sizes = [8, 16], strides = [1, 1]} : vector<32x32xf32> to vector<8x16xf32>
    %cst_20 = arith.constant dense<0.000000e+00> : vector<8x16xf32>
    %57 = tpu.matmul %56, %55, %cst_20 {dimension_numbers = #tpu.dot_dimension_numbers<[1], [1], [0], [0], [0, 0, 1, 0], [], []>} : vector<8x16xf32>, vector<16x16xf32>, vector<8x16xf32> -> vector<8x16xf32>
    %58 = vector.extract_strided_slice %48 {offsets = [48, 0], sizes = [16, 16], strides = [1, 1]} : vector<128x16xf32> to vector<16x16xf32>
    %59 = vector.extract_strided_slice %12 {offsets = [24, 0], sizes = [8, 16], strides = [1, 1]} : vector<32x32xf32> to vector<8x16xf32>
    %cst_21 = arith.constant dense<0.000000e+00> : vector<8x16xf32>
    %60 = tpu.matmul %59, %58, %cst_21 {dimension_numbers = #tpu.dot_dimension_numbers<[1], [1], [0], [0], [0, 0, 1, 0], [], []>} : vector<8x16xf32>, vector<16x16xf32>, vector<8x16xf32> -> vector<8x16xf32>
    %61 = tpu.concatenate %51, %54, %57, %60 in 0 : vector<8x16xf32>, vector<8x16xf32>, vector<8x16xf32>, vector<8x16xf32> -> vector<32x16xf32>
    %62 = vector.extract_strided_slice %48 {offsets = [64, 0], sizes = [16, 16], strides = [1, 1]} : vector<128x16xf32> to vector<16x16xf32>
    %63 = vector.extract_strided_slice %12 {offsets = [0, 16], sizes = [8, 16], strides = [1, 1]} : vector<32x32xf32> to vector<8x16xf32>
    %cst_22 = arith.constant dense<0.000000e+00> : vector<8x16xf32>
    %64 = tpu.matmul %63, %62, %cst_22 {dimension_numbers = #tpu.dot_dimension_numbers<[1], [1], [0], [0], [0, 0, 1, 0], [], []>} : vector<8x16xf32>, vector<16x16xf32>, vector<8x16xf32> -> vector<8x16xf32>
    %65 = vector.extract_strided_slice %48 {offsets = [80, 0], sizes = [16, 16], strides = [1, 1]} : vector<128x16xf32> to vector<16x16xf32>
    %66 = vector.extract_strided_slice %12 {offsets = [8, 16], sizes = [8, 16], strides = [1, 1]} : vector<32x32xf32> to vector<8x16xf32>
    %cst_23 = arith.constant dense<0.000000e+00> : vector<8x16xf32>
    %67 = tpu.matmul %66, %65, %cst_23 {dimension_numbers = #tpu.dot_dimension_numbers<[1], [1], [0], [0], [0, 0, 1, 0], [], []>} : vector<8x16xf32>, vector<16x16xf32>, vector<8x16xf32> -> vector<8x16xf32>
    %68 = vector.extract_strided_slice %48 {offsets = [96, 0], sizes = [16, 16], strides = [1, 1]} : vector<128x16xf32> to vector<16x16xf32>
    %69 = vector.extract_strided_slice %12 {offsets = [16, 16], sizes = [8, 16], strides = [1, 1]} : vector<32x32xf32> to vector<8x16xf32>
    %cst_24 = arith.constant dense<0.000000e+00> : vector<8x16xf32>
    %70 = tpu.matmul %69, %68, %cst_24 {dimension_numbers = #tpu.dot_dimension_numbers<[1], [1], [0], [0], [0, 0, 1, 0], [], []>} : vector<8x16xf32>, vector<16x16xf32>, vector<8x16xf32> -> vector<8x16xf32>
    %71 = vector.extract_strided_slice %48 {offsets = [112, 0], sizes = [16, 16], strides = [1, 1]} : vector<128x16xf32> to vector<16x16xf32>
    %72 = vector.extract_strided_slice %12 {offsets = [24, 16], sizes = [8, 16], strides = [1, 1]} : vector<32x32xf32> to vector<8x16xf32>
    %cst_25 = arith.constant dense<0.000000e+00> : vector<8x16xf32>
    %73 = tpu.matmul %72, %71, %cst_25 {dimension_numbers = #tpu.dot_dimension_numbers<[1], [1], [0], [0], [0, 0, 1, 0], [], []>} : vector<8x16xf32>, vector<16x16xf32>, vector<8x16xf32> -> vector<8x16xf32>
    %74 = tpu.concatenate %64, %67, %70, %73 in 0 : vector<8x16xf32>, vector<8x16xf32>, vector<8x16xf32>, vector<8x16xf32> -> vector<32x16xf32>
    %75 = tpu.concatenate %61, %74 in 1 : vector<32x16xf32>, vector<32x16xf32> -> vector<32x32xf32>
    %c0_26 = arith.constant 0 : index
    %c0_27 = arith.constant 0 : index
    %76 = vector.load %arg3[%c0_26, %c0_27] : memref<32x32xf32, #tpu.memory_space<vmem>>, vector<32x32xf32>
    %cst_28 = arith.constant dense<0.000000e+00> : vector<32x32xf32>
    %77 = tpu.matmul %76, %75, %cst_28 {dimension_numbers = #tpu.dot_dimension_numbers<[1], [0], [0], [1], [0, 0, 1, 1], [], []>} : vector<32x32xf32>, vector<32x32xf32>, vector<32x32xf32> -> vector<32x32xf32>
    %c0_29 = arith.constant 0 : index
    %c0_30 = arith.constant 0 : index
    %78 = vector.load %arg4[%c0_29, %c0_30] : memref<32x1xf32, #tpu.memory_space<vmem>>, vector<32x1xf32>
    %79 = vector.broadcast %78 : vector<32x1xf32> to vector<32x32xf32>
    %80 = arith.addf %77, %79 : vector<32x32xf32>
    %81 = vector.extract_strided_slice %80 {offsets = [0, 0], sizes = [32, 16], strides = [1, 1]} : vector<32x32xf32> to vector<32x16xf32>
    %c0_31 = arith.constant 0 : index
    %c0_32 = arith.constant 0 : index
    %c0_33 = arith.constant 0 : index
    %82 = vector.load %arg5[%c0_31, %c0_32, %c0_33] : memref<2x32x16xf32, #tpu.memory_space<vmem>>, vector<1x32x16xf32>
    %83 = vector.shape_cast %82 : vector<1x32x16xf32> to vector<32x16xf32>
    %84 = vector.shape_cast %81 : vector<32x16xf32> to vector<1x32x16xf32>
    tpu.vector_store %arg5[%c0_31, %c0_32, %c0_33], %84 {strides = array<i32>} : memref<2x32x16xf32, #tpu.memory_space<vmem>>, vector<1x32x16xf32>,
    %85 = vector.extract_strided_slice %80 {offsets = [0, 16], sizes = [32, 16], strides = [1, 1]} : vector<32x32xf32> to vector<32x16xf32>
    %c1_34 = arith.constant 1 : index
    %c0_35 = arith.constant 0 : index
    %c0_36 = arith.constant 0 : index
    %86 = vector.load %arg5[%c1_34, %c0_35, %c0_36] : memref<2x32x16xf32, #tpu.memory_space<vmem>>, vector<1x32x16xf32>
    %87 = vector.shape_cast %86 : vector<1x32x16xf32> to vector<32x16xf32>
    %88 = vector.shape_cast %85 : vector<32x16xf32> to vector<1x32x16xf32>
    tpu.vector_store %arg5[%c1_34, %c0_35, %c0_36], %88 {strides = array<i32>} : memref<2x32x16xf32, #tpu.memory_space<vmem>>, vector<1x32x16xf32>,
    return
  }
}

</mosaic_0001>

<llo_original>
// kernel: tpu_custom_call.1
$region0: #{tpu_custom_call.1}
  #allocation0 [shape = 'u32[]', space=smem, size = 0x4, offset = 0x4, fixed_abs, tag = 'smem constant byte address 0x4 - core index']
  #allocation1 [shape = 'u32[144,128]{1,0:T(1,128)}', space=vmem, size = 0x12000, scoped, tag = 'internal scratch']
  %s0 = inlined_call_operand.vmem [shape: f32[2,32,16], index: 0, kind: input, shape index: {}]
  %s1 = inlined_call_operand.vmem [shape: f32[96,32], index: 1, kind: input, shape index: {}]
  %s2 = inlined_call_operand.vmem [shape: f32[96,1], index: 2, kind: input, shape index: {}]
  %s3 = inlined_call_operand.vmem [shape: f32[32,32], index: 3, kind: input, shape index: {}]
  %s4 = inlined_call_operand.vmem [shape: f32[32,1], index: 4, kind: input, shape index: {}]
  %s5 = inlined_call_operand.vmem [shape: f32[2,32,16], index: 5, kind: output, shape index: {}]
  %s6 = sld [smem:[#allocation0]]
  $region30: #{tpu_custom_call.1} parent=0
    _
  %s8 = ssub.s32 1, %s6
  %s9 = scalar_select 0, %s8, %s6
  // Predicated region
  $region2: #{tpu_custom_call.1} parent=0 // pred_check
    _
  $region3: #{tpu_custom_call.1} parent=0 // pred_check_branch
    %11 = sbr.rel (0) target = $region5
  $region4: #{tpu_custom_call.1} parent=0 // pred_region
    _
  $region5: #{tpu_custom_call.1} parent=0 // pred_fallthru
    _
  // Predicated region
  $region6: #{tpu_custom_call.1} parent=0 // pred_check
    _
  $region7: #{tpu_custom_call.1} parent=0 // pred_check_branch
    %13 = sbr.rel (0) target = $region9
  $region8: #{tpu_custom_call.1} parent=0 // pred_region
    _
  $region9: #{tpu_custom_call.1} parent=0 // pred_fallthru
    _
  // Predicated region
  $region10: #{tpu_custom_call.1} parent=0 // pred_check
    _
  $region11: #{tpu_custom_call.1} parent=0 // pred_check_branch
    %15 = sbr.rel (0) target = $region13
  $region12: #{tpu_custom_call.1} parent=0 // pred_region
    _
  $region13: #{tpu_custom_call.1} parent=0 // pred_fallthru
    _
  // Predicated region
  $region14: #{tpu_custom_call.1} parent=0 // pred_check
    _
  $region15: #{tpu_custom_call.1} parent=0 // pred_check_branch
    %17 = sbr.rel (0) target = $region17
  $region16: #{tpu_custom_call.1} parent=0 // pred_region
    _
  $region17: #{tpu_custom_call.1} parent=0 // pred_fallthru
    _
  // Predicated region
  $region18: #{tpu_custom_call.1} parent=0 // pred_check
    _
  $region19: #{tpu_custom_call.1} parent=0 // pred_check_branch
    %19 = sbr.rel (0) target = $region21
  $region20: #{tpu_custom_call.1} parent=0 // pred_region
    _
  $region21: #{tpu_custom_call.1} parent=0 // pred_fallthru
    _
  %v20 = vld [vmem:[%s0] sm:$0xff]
  %v21 = vld [vmem:[%s0 + $0x8] sm:$0xff]
  %v22 = vld [vmem:[%s0 + $0x10] sm:$0xff]
  %v23 = vld [vmem:[%s0 + $0x18] sm:$0xff]
  %s24 = scalar_lea.vmem %s0, 32
  %v25 = vld [vmem:[%s24] sm:$0xff]
  %v26 = vld [vmem:[%s24 + $0x8] sm:$0xff]
  %v27 = vld [vmem:[%s24 + $0x10] sm:$0xff]
  %v28 = vld [vmem:[%s24 + $0x18] sm:$0xff]
  %33 = vrot.lane.b32.xlu0 %v25, 16
  %v34 = vpop.permute.xlu0 %33
  %35 = vrot.lane.b32.xlu0 %v26, 16
  %v36 = vpop.permute.xlu0 %35
  %37 = vrot.lane.b32.xlu0 %v27, 16
  %v38 = vpop.permute.xlu0 %37
  %39 = vrot.lane.b32.xlu0 %v28, 16
  %v40 = vpop.permute.xlu0 %39
  %vm45 = vcmask 130048
  %v46 = vsel %vm45, %v20, %v34
  %v47 = vsel %vm45, %v21, %v36
  %v48 = vsel %vm45, %v22, %v38
  %v49 = vsel %vm45, %v23, %v40
  %v50 = vld [vmem:[%s1] sm:$0xff]
  %v51 = vld [vmem:[%s1 + $0x8] sm:$0xff]
  %v52 = vld [vmem:[%s1 + $0x10] sm:$0xff]
  %v53 = vld [vmem:[%s1 + $0x18] sm:$0xff]
  %v54 = vld [vmem:[%s1 + $0x20] sm:$0xff]
  %v55 = vld [vmem:[%s1 + $0x28] sm:$0xff]
  %v56 = vld [vmem:[%s1 + $0x30] sm:$0xff]
  %v57 = vld [vmem:[%s1 + $0x38] sm:$0xff]
  %v58 = vld [vmem:[%s1 + $0x40] sm:$0xff]
  %v59 = vld [vmem:[%s1 + $0x48] sm:$0xff]
  %v60 = vld [vmem:[%s1 + $0x50] sm:$0xff]
  %v61 = vld [vmem:[%s1 + $0x58] sm:$0xff]
  %v62 = vld [vmem:[%s2] sm:$0xff]
  %v63 = vld [vmem:[%s2 + $0x8] sm:$0xff]
  %v64 = vld [vmem:[%s2 + $0x10] sm:$0xff]
  %v65 = vld [vmem:[%s2 + $0x18] sm:$0xff]
  %v66 = vld [vmem:[%s2 + $0x20] sm:$0xff]
  %v67 = vld [vmem:[%s2 + $0x28] sm:$0xff]
  %v68 = vld [vmem:[%s2 + $0x30] sm:$0xff]
  %v69 = vld [vmem:[%s2 + $0x38] sm:$0xff]
  %v70 = vld [vmem:[%s2 + $0x40] sm:$0xff]
  %v71 = vld [vmem:[%s2 + $0x48] sm:$0xff]
  %v72 = vld [vmem:[%s2 + $0x50] sm:$0xff]
  %v73 = vld [vmem:[%s2 + $0x58] sm:$0xff]
  %75 = vset.pattern.permute.xlu0 0
  %76 = vperm.xlu0 %75, %v62
  %v77 = vpop.permute.xlu0 %76
  %80 = vset.pattern.permute.xlu0 0
  %81 = vperm.xlu0 %80, %v63
  %v82 = vpop.permute.xlu0 %81
  %85 = vset.pattern.permute.xlu0 0
  %86 = vperm.xlu0 %85, %v64
  %v87 = vpop.permute.xlu0 %86
  %90 = vset.pattern.permute.xlu0 0
  %91 = vperm.xlu0 %90, %v65
  %v92 = vpop.permute.xlu0 %91
  %95 = vset.pattern.permute.xlu0 0
  %96 = vperm.xlu0 %95, %v66
  %v97 = vpop.permute.xlu0 %96
  %100 = vset.pattern.permute.xlu0 0
  %101 = vperm.xlu0 %100, %v67
  %v102 = vpop.permute.xlu0 %101
  %105 = vset.pattern.permute.xlu0 0
  %106 = vperm.xlu0 %105, %v68
  %v107 = vpop.permute.xlu0 %106
  %110 = vset.pattern.permute.xlu0 0
  %111 = vperm.xlu0 %110, %v69
  %v112 = vpop.permute.xlu0 %111
  %115 = vset.pattern.permute.xlu0 0
  %116 = vperm.xlu0 %115, %v70
  %v117 = vpop.permute.xlu0 %116
  %120 = vset.pattern.permute.xlu0 0
  %121 = vperm.xlu0 %120, %v71
  %v122 = vpop.permute.xlu0 %121
  %125 = vset.pattern.permute.xlu0 0
  %126 = vperm.xlu0 %125, %v72
  %v127 = vpop.permute.xlu0 %126
  %130 = vset.pattern.permute.xlu0 0
  %131 = vperm.xlu0 %130, %v73
  %v132 = vpop.permute.xlu0 %131
  %vm134 = vcmask 261120
  %v136 = vsel %vm134, %v50, 0
  %v139 = vsel %vm134, %v51, 0
  %v142 = vsel %vm134, %v52, 0
  %v145 = vsel %vm134, %v53, 0
  %v148 = vsel %vm134, %v54, 0
  %v151 = vsel %vm134, %v55, 0
  %v154 = vsel %vm134, %v56, 0
  %v157 = vsel %vm134, %v57, 0
  %v160 = vsel %vm134, %v58, 0
  %v163 = vsel %vm134, %v59, 0
  %v166 = vsel %vm134, %v60, 0
  %v169 = vsel %vm134, %v61, 0
  %171 = vmatprep.subr.mxu0 0.0
  %172 = vmatpush1.msra.mxu0 %v46
  %173 = vmatprep.subr.mxu0 0.0
  %174 = vmatpush1.msra.mxu0 %v47
  %175 = vmatprep.subr.mxu0 0.0
  %176 = vmatpush1.msra.mxu0 %v48
  %177 = vmatprep.subr.mxu0 0.0
  %178 = vmatpush1.msra.mxu0 %v49
  %179 = vmatprep.subr.mxu0 0.0
  %180 = vmatpush1.msra.mxu0 0.0
  %181 = vmatprep.subr.mxu0 0.0
  %182 = vmatpush1.msra.mxu0 0.0
  %183 = vmatprep.subr.mxu0 0.0
  %184 = vmatpush1.msra.mxu0 0.0
  %185 = vmatprep.subr.mxu0 0.0
  %186 = vmatpush1.msra.mxu0 0.0
  %187 = vmatprep.subr.mxu0 0.0
  %188 = vmatpush1.msra.mxu0 0.0
  %189 = vmatprep.subr.mxu0 0.0
  %190 = vmatpush1.msra.mxu0 0.0
  %191 = vmatprep.subr.mxu0 0.0
  %192 = vmatpush1.msra.mxu0 0.0
  %193 = vmatprep.subr.mxu0 0.0
  %194 = vmatpush1.msra.mxu0 0.0
  %195 = vmatprep.subr.mxu0 0.0
  %196 = vmatpush1.msra.mxu0 0.0
  %197 = vmatprep.subr.mxu0 0.0
  %198 = vmatpush1.msra.mxu0 0.0
  %199 = vmatprep.subr.mxu0 0.0
  %200 = vmatpush1.msra.mxu0 0.0
  %201 = vmatprep.subr.mxu0 0.0
  %202 = vmatpush1.msra.mxu0 0.0
  %203 = vmatprep.subr.mxu0 0.0
  %204 = vmatpush1.msra.mxu0 0.0
  %205 = vmatprep.subr.mxu0 0.0
  %206 = vmatpush1.msra.mxu0 0.0
  %207 = vmatprep.subr.mxu0 0.0
  %208 = vmatpush1.msra.mxu0 0.0
  %209 = vmatprep.subr.mxu0 0.0
  %210 = vmatpush1.msra.mxu0 0.0
  %211 = vmatprep.subr.mxu0 0.0
  %212 = vmatpush1.msra.mxu0 0.0
  %213 = vmatprep.subr.mxu0 0.0
  %214 = vmatpush1.msra.mxu0 0.0
  %215 = vmatprep.subr.mxu0 0.0
  %216 = vmatpush1.msra.mxu0 0.0
  %217 = vmatprep.subr.mxu0 0.0
  %218 = vmatpush1.msra.mxu0 0.0
  %219 = vmatprep.subr.mxu0 0.0
  %220 = vmatpush1.msra.mxu0 0.0
  %221 = vmatprep.subr.mxu0 0.0
  %222 = vmatpush1.msra.mxu0 0.0
  %223 = vmatprep.subr.mxu0 0.0
  %224 = vmatpush1.msra.mxu0 0.0
  %225 = vmatprep.subr.mxu0 0.0
  %226 = vmatpush1.msra.mxu0 0.0
  %227 = vmatprep.subr.mxu0 0.0
  %228 = vmatpush1.msra.mxu0 0.0
  %229 = vmatprep.subr.mxu0 0.0
  %230 = vmatpush1.msra.mxu0 0.0
  %231 = vmatprep.subr.mxu0 0.0
  %232 = vmatpush1.msra.mxu0 0.0
  %233 = vmatprep.subr.mxu0 0.0
  %234 = vmatpush1.msra.mxu0 0.0
  %235 = vmatprep.mubr.f32.mxu0 0.0
  %236 = vmatmul.mubr.f32.gmra.mrb[0].mxu0 %v136
  %v237 = vpop.f32.mrb[0].mxu0
  %v238 = vadd.f32 %v77, %v237
  %v239 = vpop.f32.mrb[0].mxu0
  %240 = vmatprep.mubr.f32.mxu0 0.0
  %241 = vmatmul.mubr.f32.gmra.mrb[0].mxu0 %v139
  %v242 = vpop.f32.mrb[0].mxu0
  %v243 = vadd.f32 %v82, %v242
  %v244 = vpop.f32.mrb[0].mxu0
  %245 = vmatprep.mubr.f32.mxu0 0.0
  %246 = vmatmul.mubr.f32.gmra.mrb[0].mxu0 %v142
  %v247 = vpop.f32.mrb[0].mxu0
  %v248 = vadd.f32 %v87, %v247
  %v249 = vpop.f32.mrb[0].mxu0
  %250 = vmatprep.mubr.f32.mxu0 0.0
  %251 = vmatmul.mubr.f32.gmra.mrb[0].mxu0 %v145
  %v252 = vpop.f32.mrb[0].mxu0
  %v253 = vadd.f32 %v92, %v252
  %v254 = vpop.f32.mrb[0].mxu0
  %255 = vmatprep.mubr.f32.mxu0 0.0
  %256 = vmatmul.mubr.f32.gmra.mrb[0].mxu0 %v148
  %v257 = vpop.f32.mrb[0].mxu0
  %v258 = vadd.f32 %v97, %v257
  %v259 = vpop.f32.mrb[0].mxu0
  %260 = vmatprep.mubr.f32.mxu0 0.0
  %261 = vmatmul.mubr.f32.gmra.mrb[0].mxu0 %v151
  %v262 = vpop.f32.mrb[0].mxu0
  %v263 = vadd.f32 %v102, %v262
  %v264 = vpop.f32.mrb[0].mxu0
  %265 = vmatprep.mubr.f32.mxu0 0.0
  %266 = vmatmul.mubr.f32.gmra.mrb[0].mxu0 %v154
  %v267 = vpop.f32.mrb[0].mxu0
  %v268 = vadd.f32 %v107, %v267
  %v269 = vpop.f32.mrb[0].mxu0
  %270 = vmatprep.mubr.f32.mxu0 0.0
  %271 = vmatmul.mubr.f32.gmra.mrb[0].mxu0 %v157
  %v272 = vpop.f32.mrb[0].mxu0
  %v273 = vadd.f32 %v112, %v272
  %v274 = vpop.f32.mrb[0].mxu0
  %275 = vmatprep.mubr.f32.mxu0 0.0
  %276 = vmatmul.mubr.f32.gmra.mrb[0].mxu0 %v160
  %v277 = vpop.f32.mrb[0].mxu0
  %v278 = vadd.f32 %v117, %v277
  %v279 = vpop.f32.mrb[0].mxu0
  %280 = vmatprep.mubr.f32.mxu0 0.0
  %281 = vmatmul.mubr.f32.gmra.mrb[0].mxu0 %v163
  %v282 = vpop.f32.mrb[0].mxu0
  %v283 = vadd.f32 %v122, %v282
  %v284 = vpop.f32.mrb[0].mxu0
  %285 = vmatprep.mubr.f32.mxu0 0.0
  %286 = vmatmul.mubr.f32.gmra.mrb[0].mxu0 %v166
  %v287 = vpop.f32.mrb[0].mxu0
  %v288 = vadd.f32 %v127, %v287
  %v289 = vpop.f32.mrb[0].mxu0
  %290 = vmatprep.mubr.f32.mxu0 0.0
  %291 = vmatmul.mubr.f32.gmra.mrb[0].mxu0 %v169
  %v292 = vpop.f32.mrb[0].mxu0
  %v293 = vadd.f32 %v132, %v292
  %v294 = vpop.f32.mrb[0].mxu0
  %295 = vdwg.mxu0
  %296 = vxpose.xlu0.b32.start [1/16] %v238, 128
  %297 = vxpose.xlu0.b32.cont [2/16] %v243, 128
  %298 = vxpose.xlu0.b32.cont [3/16] %v248, 128
  %299 = vxpose.xlu0.b32.cont [4/16] %v253, 128
  %300 = vxpose.xlu0.b32.cont [5/16] 0.0, 128
  %301 = vxpose.xlu0.b32.cont [6/16] 0.0, 128
  %302 = vxpose.xlu0.b32.cont [7/16] 0.0, 128
  %303 = vxpose.xlu0.b32.cont [8/16] 0.0, 128
  %304 = vxpose.xlu0.b32.cont [9/16] 0.0, 128
  %305 = vxpose.xlu0.b32.cont [10/16] 0.0, 128
  %306 = vxpose.xlu0.b32.cont [11/16] 0.0, 128
  %307 = vxpose.xlu0.b32.cont [12/16] 0.0, 128
  %308 = vxpose.xlu0.b32.cont [13/16] 0.0, 128
  %309 = vxpose.xlu0.b32.cont [14/16] 0.0, 128
  %310 = vxpose.xlu0.b32.cont [15/16] 0.0, 128
  %311 = vxpose.xlu0.b32.end [16/16] 0.0, 128
  %v312 = vpop.trf.xlu0
  %v313 = vpop.trf.xlu0
  %v314 = vpop.trf.xlu0
  %v315 = vpop.trf.xlu0
  %v316 = vpop.trf.xlu0
  %v317 = vpop.trf.xlu0
  %v318 = vpop.trf.xlu0
  %v319 = vpop.trf.xlu0
  %v320 = vpop.trf.xlu0
  %v321 = vpop.trf.xlu0
  %v322 = vpop.trf.xlu0
  %v323 = vpop.trf.xlu0
  %v324 = vpop.trf.xlu0
  %v325 = vpop.trf.xlu0
  %v326 = vpop.trf.xlu0
  %v327 = vpop.trf.xlu0
  %vm328 = vcmask 64512
  %v330 = vsel %vm328, %v312, 0
  %v333 = vsel %vm328, %v313, 0
  %335 = vmatprep.subr.mxu0 0.0
  %336 = vmatpush1.msra.mxu0 %v258
  %337 = vmatprep.subr.mxu0 0.0
  %338 = vmatpush1.msra.mxu0 0.0
  %339 = vmatprep.subr.mxu0 0.0
  %340 = vmatpush1.msra.mxu0 0.0
  %341 = vmatprep.subr.mxu0 0.0
  %342 = vmatpush1.msra.mxu0 0.0
  %343 = vmatprep.subr.mxu0 0.0
  %344 = vmatpush1.msra.mxu0 0.0
  %345 = vmatprep.subr.mxu0 0.0
  %346 = vmatpush1.msra.mxu0 0.0
  %347 = vmatprep.subr.mxu0 0.0
  %348 = vmatpush1.msra.mxu0 0.0
  %349 = vmatprep.subr.mxu0 0.0
  %350 = vmatpush1.msra.mxu0 0.0
  %351 = vmatprep.subr.mxu0 0.0
  %352 = vmatpush1.msra.mxu0 0.0
  %353 = vmatprep.subr.mxu0 0.0
  %354 = vmatpush1.msra.mxu0 0.0
  %355 = vmatprep.subr.mxu0 0.0
  %356 = vmatpush1.msra.mxu0 0.0
  %357 = vmatprep.subr.mxu0 0.0
  %358 = vmatpush1.msra.mxu0 0.0
  %359 = vmatprep.subr.mxu0 0.0
  %360 = vmatpush1.msra.mxu0 0.0
  %361 = vmatprep.subr.mxu0 0.0
  %362 = vmatpush1.msra.mxu0 0.0
  %363 = vmatprep.subr.mxu0 0.0
  %364 = vmatpush1.msra.mxu0 0.0
  %365 = vmatprep.subr.mxu0 0.0
  %366 = vmatpush1.msra.mxu0 0.0
  %367 = vmatprep.subr.mxu0 0.0
  %368 = vmatpush1.msra.mxu0 0.0
  %369 = vmatprep.subr.mxu0 0.0
  %370 = vmatpush1.msra.mxu0 0.0
  %371 = vmatprep.subr.mxu0 0.0
  %372 = vmatpush1.msra.mxu0 0.0
  %373 = vmatprep.subr.mxu0 0.0
  %374 = vmatpush1.msra.mxu0 0.0
  %375 = vmatprep.subr.mxu0 0.0
  %376 = vmatpush1.msra.mxu0 0.0
  %377 = vmatprep.subr.mxu0 0.0
  %378 = vmatpush1.msra.mxu0 0.0
  %379 = vmatprep.subr.mxu0 0.0
  %380 = vmatpush1.msra.mxu0 0.0
  %381 = vmatprep.subr.mxu0 0.0
  %382 = vmatpush1.msra.mxu0 0.0
  %383 = vmatprep.subr.mxu0 0.0
  %384 = vmatpush1.msra.mxu0 0.0
  %385 = vmatprep.subr.mxu0 0.0
  %386 = vmatpush1.msra.mxu0 0.0
  %387 = vmatprep.subr.mxu0 0.0
  %388 = vmatpush1.msra.mxu0 0.0
  %389 = vmatprep.subr.mxu0 0.0
  %390 = vmatpush1.msra.mxu0 0.0
  %391 = vmatprep.subr.mxu0 0.0
  %392 = vmatpush1.msra.mxu0 0.0
  %393 = vmatprep.subr.mxu0 0.0
  %394 = vmatpush1.msra.mxu0 0.0
  %395 = vmatprep.subr.mxu0 0.0
  %396 = vmatpush1.msra.mxu0 0.0
  %397 = vmatprep.subr.mxu0 0.0
  %398 = vmatpush1.msra.mxu0 0.0
  %399 = vmatprep.mubr.f32.mxu0 0.0
  %400 = vmatmul.mubr.f32.gmra.mrb[0].mxu0 %v330
  %v401 = vpop.f32.mrb[0].mxu0
  %v402 = vadd.f32 0.0, %v401
  %v403 = vpop.f32.mrb[0].mxu0
  %404 = vmatprep.mubr.f32.mxu0 0.0
  %405 = vmatmul.mubr.f32.gmra.mrb[0].mxu0 %v333
  %v406 = vpop.f32.mrb[0].mxu0
  %v407 = vadd.f32 0.0, %v406
  %v408 = vpop.f32.mrb[0].mxu0
  %409 = vdwg.mxu0
  %410 = vrot.lane.b32.xlu0 %v312, 120
  %v411 = vpop.permute.xlu0 %410
  %412 = vrot.lane.b32.xlu0 %v313, 120
  %v413 = vpop.permute.xlu0 %412
  %v414 = vsel %vm328, %v411, 0
  %v416 = vsel %vm328, %v413, 0
  %418 = vmatprep.subr.mxu0 0.0
  %419 = vmatpush1.msra.mxu0 %v263
  %420 = vmatprep.subr.mxu0 0.0
  %421 = vmatpush1.msra.mxu0 0.0
  %422 = vmatprep.subr.mxu0 0.0
  %423 = vmatpush1.msra.mxu0 0.0
  %424 = vmatprep.subr.mxu0 0.0
  %425 = vmatpush1.msra.mxu0 0.0
  %426 = vmatprep.subr.mxu0 0.0
  %427 = vmatpush1.msra.mxu0 0.0
  %428 = vmatprep.subr.mxu0 0.0
  %429 = vmatpush1.msra.mxu0 0.0
  %430 = vmatprep.subr.mxu0 0.0
  %431 = vmatpush1.msra.mxu0 0.0
  %432 = vmatprep.subr.mxu0 0.0
  %433 = vmatpush1.msra.mxu0 0.0
  %434 = vmatprep.subr.mxu0 0.0
  %435 = vmatpush1.msra.mxu0 0.0
  %436 = vmatprep.subr.mxu0 0.0
  %437 = vmatpush1.msra.mxu0 0.0
  %438 = vmatprep.subr.mxu0 0.0
  %439 = vmatpush1.msra.mxu0 0.0
  %440 = vmatprep.subr.mxu0 0.0
  %441 = vmatpush1.msra.mxu0 0.0
  %442 = vmatprep.subr.mxu0 0.0
  %443 = vmatpush1.msra.mxu0 0.0
  %444 = vmatprep.subr.mxu0 0.0
  %445 = vmatpush1.msra.mxu0 0.0
  %446 = vmatprep.subr.mxu0 0.0
  %447 = vmatpush1.msra.mxu0 0.0
  %448 = vmatprep.subr.mxu0 0.0
  %449 = vmatpush1.msra.mxu0 0.0
  %450 = vmatprep.subr.mxu0 0.0
  %451 = vmatpush1.msra.mxu0 0.0
  %452 = vmatprep.subr.mxu0 0.0
  %453 = vmatpush1.msra.mxu0 0.0
  %454 = vmatprep.subr.mxu0 0.0
  %455 = vmatpush1.msra.mxu0 0.0
  %456 = vmatprep.subr.mxu0 0.0
  %457 = vmatpush1.msra.mxu0 0.0
  %458 = vmatprep.subr.mxu0 0.0
  %459 = vmatpush1.msra.mxu0 0.0
  %460 = vmatprep.subr.mxu0 0.0
  %461 = vmatpush1.msra.mxu0 0.0
  %462 = vmatprep.subr.mxu0 0.0
  %463 = vmatpush1.msra.mxu0 0.0
  %464 = vmatprep.subr.mxu0 0.0
  %465 = vmatpush1.msra.mxu0 0.0
  %466 = vmatprep.subr.mxu0 0.0
  %467 = vmatpush1.msra.mxu0 0.0
  %468 = vmatprep.subr.mxu0 0.0
  %469 = vmatpush1.msra.mxu0 0.0
  %470 = vmatprep.subr.mxu0 0.0
  %471 = vmatpush1.msra.mxu0 0.0
  %472 = vmatprep.subr.mxu0 0.0
  %473 = vmatpush1.msra.mxu0 0.0
  %474 = vmatprep.subr.mxu0 0.0
  %475 = vmatpush1.msra.mxu0 0.0
  %476 = vmatprep.subr.mxu0 0.0
  %477 = vmatpush1.msra.mxu0 0.0
  %478 = vmatprep.subr.mxu0 0.0
  %479 = vmatpush1.msra.mxu0 0.0
  %480 = vmatprep.subr.mxu0 0.0
  %481 = vmatpush1.msra.mxu0 0.0
  %482 = vmatprep.mubr.f32.mxu0 0.0
  %483 = vmatmul.mubr.f32.gmra.mrb[0].mxu0 %v414
  %v484 = vpop.f32.mrb[0].mxu0
  %v485 = vadd.f32 0.0, %v484
  %v486 = vpop.f32.mrb[0].mxu0
  %487 = vmatprep.mubr.f32.mxu0 0.0
  %488 = vmatmul.mubr.f32.gmra.mrb[0].mxu0 %v416
  %v489 = vpop.f32.mrb[0].mxu0
  %v490 = vadd.f32 0.0, %v489
  %v491 = vpop.f32.mrb[0].mxu0
  %492 = vdwg.mxu0
  %493 = vrot.lane.b32.xlu0 %v312, 112
  %v494 = vpop.permute.xlu0 %493
  %495 = vrot.lane.b32.xlu0 %v313, 112
  %v496 = vpop.permute.xlu0 %495
  %v497 = vsel %vm328, %v494, 0
  %v499 = vsel %vm328, %v496, 0
  %501 = vmatprep.subr.mxu0 0.0
  %502 = vmatpush1.msra.mxu0 %v268
  %503 = vmatprep.subr.mxu0 0.0
  %504 = vmatpush1.msra.mxu0 0.0
  %505 = vmatprep.subr.mxu0 0.0
  %506 = vmatpush1.msra.mxu0 0.0
  %507 = vmatprep.subr.mxu0 0.0
  %508 = vmatpush1.msra.mxu0 0.0
  %509 = vmatprep.subr.mxu0 0.0
  %510 = vmatpush1.msra.mxu0 0.0
  %511 = vmatprep.subr.mxu0 0.0
  %512 = vmatpush1.msra.mxu0 0.0
  %513 = vmatprep.subr.mxu0 0.0
  %514 = vmatpush1.msra.mxu0 0.0
  %515 = vmatprep.subr.mxu0 0.0
  %516 = vmatpush1.msra.mxu0 0.0
  %517 = vmatprep.subr.mxu0 0.0
  %518 = vmatpush1.msra.mxu0 0.0
  %519 = vmatprep.subr.mxu0 0.0
  %520 = vmatpush1.msra.mxu0 0.0
  %521 = vmatprep.subr.mxu0 0.0
  %522 = vmatpush1.msra.mxu0 0.0
  %523 = vmatprep.subr.mxu0 0.0
  %524 = vmatpush1.msra.mxu0 0.0
  %525 = vmatprep.subr.mxu0 0.0
  %526 = vmatpush1.msra.mxu0 0.0
  %527 = vmatprep.subr.mxu0 0.0
  %528 = vmatpush1.msra.mxu0 0.0
  %529 = vmatprep.subr.mxu0 0.0
  %530 = vmatpush1.msra.mxu0 0.0
  %531 = vmatprep.subr.mxu0 0.0
  %532 = vmatpush1.msra.mxu0 0.0
  %533 = vmatprep.subr.mxu0 0.0
  %534 = vmatpush1.msra.mxu0 0.0
  %535 = vmatprep.subr.mxu0 0.0
  %536 = vmatpush1.msra.mxu0 0.0
  %537 = vmatprep.subr.mxu0 0.0
  %538 = vmatpush1.msra.mxu0 0.0
  %539 = vmatprep.subr.mxu0 0.0
  %540 = vmatpush1.msra.mxu0 0.0
  %541 = vmatprep.subr.mxu0 0.0
  %542 = vmatpush1.msra.mxu0 0.0
  %543 = vmatprep.subr.mxu0 0.0
  %544 = vmatpush1.msra.mxu0 0.0
  %545 = vmatprep.subr.mxu0 0.0
  %546 = vmatpush1.msra.mxu0 0.0
  %547 = vmatprep.subr.mxu0 0.0
  %548 = vmatpush1.msra.mxu0 0.0
  %549 = vmatprep.subr.mxu0 0.0
  %550 = vmatpush1.msra.mxu0 0.0
  %551 = vmatprep.subr.mxu0 0.0
  %552 = vmatpush1.msra.mxu0 0.0
  %553 = vmatprep.subr.mxu0 0.0
  %554 = vmatpush1.msra.mxu0 0.0
  %555 = vmatprep.subr.mxu0 0.0
  %556 = vmatpush1.msra.mxu0 0.0
  %557 = vmatprep.subr.mxu0 0.0
  %558 = vmatpush1.msra.mxu0 0.0
  %559 = vmatprep.subr.mxu0 0.0
  %560 = vmatpush1.msra.mxu0 0.0
  %561 = vmatprep.subr.mxu0 0.0
  %562 = vmatpush1.msra.mxu0 0.0
  %563 = vmatprep.subr.mxu0 0.0
  %564 = vmatpush1.msra.mxu0 0.0
  %565 = vmatprep.mubr.f32.mxu0 0.0
  %566 = vmatmul.mubr.f32.gmra.mrb[0].mxu0 %v497
  %v567 = vpop.f32.mrb[0].mxu0
  %v568 = vadd.f32 0.0, %v567
  %v569 = vpop.f32.mrb[0].mxu0
  %570 = vmatprep.mubr.f32.mxu0 0.0
  %571 = vmatmul.mubr.f32.gmra.mrb[0].mxu0 %v499
  %v572 = vpop.f32.mrb[0].mxu0
  %v573 = vadd.f32 0.0, %v572
  %v574 = vpop.f32.mrb[0].mxu0
  %575 = vdwg.mxu0
  %576 = vrot.lane.b32.xlu0 %v312, 104
  %v577 = vpop.permute.xlu0 %576
  %578 = vrot.lane.b32.xlu0 %v313, 104
  %v579 = vpop.permute.xlu0 %578
  %v580 = vsel %vm328, %v577, 0
  %v582 = vsel %vm328, %v579, 0
  %584 = vmatprep.subr.mxu0 0.0
  %585 = vmatpush1.msra.mxu0 %v273
  %586 = vmatprep.subr.mxu0 0.0
  %587 = vmatpush1.msra.mxu0 0.0
  %588 = vmatprep.subr.mxu0 0.0
  %589 = vmatpush1.msra.mxu0 0.0
  %590 = vmatprep.subr.mxu0 0.0
  %591 = vmatpush1.msra.mxu0 0.0
  %592 = vmatprep.subr.mxu0 0.0
  %593 = vmatpush1.msra.mxu0 0.0
  %594 = vmatprep.subr.mxu0 0.0
  %595 = vmatpush1.msra.mxu0 0.0
  %596 = vmatprep.subr.mxu0 0.0
  %597 = vmatpush1.msra.mxu0 0.0
  %598 = vmatprep.subr.mxu0 0.0
  %599 = vmatpush1.msra.mxu0 0.0
  %600 = vmatprep.subr.mxu0 0.0
  %601 = vmatpush1.msra.mxu0 0.0
  %602 = vmatprep.subr.mxu0 0.0
  %603 = vmatpush1.msra.mxu0 0.0
  %604 = vmatprep.subr.mxu0 0.0
  %605 = vmatpush1.msra.mxu0 0.0
  %606 = vmatprep.subr.mxu0 0.0
  %607 = vmatpush1.msra.mxu0 0.0
  %608 = vmatprep.subr.mxu0 0.0
  %609 = vmatpush1.msra.mxu0 0.0
  %610 = vmatprep.subr.mxu0 0.0
  %611 = vmatpush1.msra.mxu0 0.0
  %612 = vmatprep.subr.mxu0 0.0
  %613 = vmatpush1.msra.mxu0 0.0
  %614 = vmatprep.subr.mxu0 0.0
  %615 = vmatpush1.msra.mxu0 0.0
  %616 = vmatprep.subr.mxu0 0.0
  %617 = vmatpush1.msra.mxu0 0.0
  %618 = vmatprep.subr.mxu0 0.0
  %619 = vmatpush1.msra.mxu0 0.0
  %620 = vmatprep.subr.mxu0 0.0
  %621 = vmatpush1.msra.mxu0 0.0
  %622 = vmatprep.subr.mxu0 0.0
  %623 = vmatpush1.msra.mxu0 0.0
  %624 = vmatprep.subr.mxu0 0.0
  %625 = vmatpush1.msra.mxu0 0.0
  %626 = vmatprep.subr.mxu0 0.0
  %627 = vmatpush1.msra.mxu0 0.0
  %628 = vmatprep.subr.mxu0 0.0
  %629 = vmatpush1.msra.mxu0 0.0
  %630 = vmatprep.subr.mxu0 0.0
  %631 = vmatpush1.msra.mxu0 0.0
  %632 = vmatprep.subr.mxu0 0.0
  %633 = vmatpush1.msra.mxu0 0.0
  %634 = vmatprep.subr.mxu0 0.0
  %635 = vmatpush1.msra.mxu0 0.0
  %636 = vmatprep.subr.mxu0 0.0
  %637 = vmatpush1.msra.mxu0 0.0
  %638 = vmatprep.subr.mxu0 0.0
  %639 = vmatpush1.msra.mxu0 0.0
  %640 = vmatprep.subr.mxu0 0.0
  %641 = vmatpush1.msra.mxu0 0.0
  %642 = vmatprep.subr.mxu0 0.0
  %643 = vmatpush1.msra.mxu0 0.0
  %644 = vmatprep.subr.mxu0 0.0
  %645 = vmatpush1.msra.mxu0 0.0
  %646 = vmatprep.subr.mxu0 0.0
  %647 = vmatpush1.msra.mxu0 0.0
  %648 = vmatprep.mubr.f32.mxu0 0.0
  %649 = vmatmul.mubr.f32.gmra.mrb[0].mxu0 %v580
  %v650 = vpop.f32.mrb[0].mxu0
  %v651 = vadd.f32 0.0, %v650
  %v652 = vpop.f32.mrb[0].mxu0
  %653 = vmatprep.mubr.f32.mxu0 0.0
  %654 = vmatmul.mubr.f32.gmra.mrb[0].mxu0 %v582
  %v655 = vpop.f32.mrb[0].mxu0
  %v656 = vadd.f32 0.0, %v655
  %v657 = vpop.f32.mrb[0].mxu0
  %658 = vdwg.mxu0
  %660 = vrot.lane.b32.xlu0 %v258, 112
  %v661 = vpop.permute.xlu0 %660
  %v664 = vsel %vm328, %v314, 0
  %v667 = vsel %vm328, %v315, 0
  %669 = vmatprep.subr.mxu0 0.0
  %670 = vmatpush1.msra.mxu0 %v661
  %671 = vmatprep.subr.mxu0 0.0
  %672 = vmatpush1.msra.mxu0 0.0
  %673 = vmatprep.subr.mxu0 0.0
  %674 = vmatpush1.msra.mxu0 0.0
  %675 = vmatprep.subr.mxu0 0.0
  %676 = vmatpush1.msra.mxu0 0.0
  %677 = vmatprep.subr.mxu0 0.0
  %678 = vmatpush1.msra.mxu0 0.0
  %679 = vmatprep.subr.mxu0 0.0
  %680 = vmatpush1.msra.mxu0 0.0
  %681 = vmatprep.subr.mxu0 0.0
  %682 = vmatpush1.msra.mxu0 0.0
  %683 = vmatprep.subr.mxu0 0.0
  %684 = vmatpush1.msra.mxu0 0.0
  %685 = vmatprep.subr.mxu0 0.0
  %686 = vmatpush1.msra.mxu0 0.0
  %687 = vmatprep.subr.mxu0 0.0
  %688 = vmatpush1.msra.mxu0 0.0
  %689 = vmatprep.subr.mxu0 0.0
  %690 = vmatpush1.msra.mxu0 0.0
  %691 = vmatprep.subr.mxu0 0.0
  %692 = vmatpush1.msra.mxu0 0.0
  %693 = vmatprep.subr.mxu0 0.0
  %694 = vmatpush1.msra.mxu0 0.0
  %695 = vmatprep.subr.mxu0 0.0
  %696 = vmatpush1.msra.mxu0 0.0
  %697 = vmatprep.subr.mxu0 0.0
  %698 = vmatpush1.msra.mxu0 0.0
  %699 = vmatprep.subr.mxu0 0.0
  %700 = vmatpush1.msra.mxu0 0.0
  %701 = vmatprep.subr.mxu0 0.0
  %702 = vmatpush1.msra.mxu0 0.0
  %703 = vmatprep.subr.mxu0 0.0
  %704 = vmatpush1.msra.mxu0 0.0
  %705 = vmatprep.subr.mxu0 0.0
  %706 = vmatpush1.msra.mxu0 0.0
  %707 = vmatprep.subr.mxu0 0.0
  %708 = vmatpush1.msra.mxu0 0.0
  %709 = vmatprep.subr.mxu0 0.0
  %710 = vmatpush1.msra.mxu0 0.0
  %711 = vmatprep.subr.mxu0 0.0
  %712 = vmatpush1.msra.mxu0 0.0
  %713 = vmatprep.subr.mxu0 0.0
  %714 = vmatpush1.msra.mxu0 0.0
  %715 = vmatprep.subr.mxu0 0.0
  %716 = vmatpush1.msra.mxu0 0.0
  %717 = vmatprep.subr.mxu0 0.0
  %718 = vmatpush1.msra.mxu0 0.0
  %719 = vmatprep.subr.mxu0 0.0
  %720 = vmatpush1.msra.mxu0 0.0
  %721 = vmatprep.subr.mxu0 0.0
  %722 = vmatpush1.msra.mxu0 0.0
  %723 = vmatprep.subr.mxu0 0.0
  %724 = vmatpush1.msra.mxu0 0.0
  %725 = vmatprep.subr.mxu0 0.0
  %726 = vmatpush1.msra.mxu0 0.0
  %727 = vmatprep.subr.mxu0 0.0
  %728 = vmatpush1.msra.mxu0 0.0
  %729 = vmatprep.subr.mxu0 0.0
  %730 = vmatpush1.msra.mxu0 0.0
  %731 = vmatprep.subr.mxu0 0.0
  %732 = vmatpush1.msra.mxu0 0.0
  %733 = vmatprep.mubr.f32.mxu0 0.0
  %734 = vmatmul.mubr.f32.gmra.mrb[0].mxu0 %v664
  %v735 = vpop.f32.mrb[0].mxu0
  %v736 = vadd.f32 0.0, %v735
  %v737 = vpop.f32.mrb[0].mxu0
  %738 = vmatprep.mubr.f32.mxu0 0.0
  %739 = vmatmul.mubr.f32.gmra.mrb[0].mxu0 %v667
  %v740 = vpop.f32.mrb[0].mxu0
  %v741 = vadd.f32 0.0, %v740
  %v742 = vpop.f32.mrb[0].mxu0
  %743 = vdwg.mxu0
  %744 = vrot.lane.b32.xlu0 %v314, 120
  %v745 = vpop.permute.xlu0 %744
  %746 = vrot.lane.b32.xlu0 %v315, 120
  %v747 = vpop.permute.xlu0 %746
  %749 = vrot.lane.b32.xlu0 %v263, 112
  %v750 = vpop.permute.xlu0 %749
  %v752 = vsel %vm328, %v745, 0
  %v754 = vsel %vm328, %v747, 0
  %756 = vmatprep.subr.mxu0 0.0
  %757 = vmatpush1.msra.mxu0 %v750
  %758 = vmatprep.subr.mxu0 0.0
  %759 = vmatpush1.msra.mxu0 0.0
  %760 = vmatprep.subr.mxu0 0.0
  %761 = vmatpush1.msra.mxu0 0.0
  %762 = vmatprep.subr.mxu0 0.0
  %763 = vmatpush1.msra.mxu0 0.0
  %764 = vmatprep.subr.mxu0 0.0
  %765 = vmatpush1.msra.mxu0 0.0
  %766 = vmatprep.subr.mxu0 0.0
  %767 = vmatpush1.msra.mxu0 0.0
  %768 = vmatprep.subr.mxu0 0.0
  %769 = vmatpush1.msra.mxu0 0.0
  %770 = vmatprep.subr.mxu0 0.0
  %771 = vmatpush1.msra.mxu0 0.0
  %772 = vmatprep.subr.mxu0 0.0
  %773 = vmatpush1.msra.mxu0 0.0
  %774 = vmatprep.subr.mxu0 0.0
  %775 = vmatpush1.msra.mxu0 0.0
  %776 = vmatprep.subr.mxu0 0.0
  %777 = vmatpush1.msra.mxu0 0.0
  %778 = vmatprep.subr.mxu0 0.0
  %779 = vmatpush1.msra.mxu0 0.0
  %780 = vmatprep.subr.mxu0 0.0
  %781 = vmatpush1.msra.mxu0 0.0
  %782 = vmatprep.subr.mxu0 0.0
  %783 = vmatpush1.msra.mxu0 0.0
  %784 = vmatprep.subr.mxu0 0.0
  %785 = vmatpush1.msra.mxu0 0.0
  %786 = vmatprep.subr.mxu0 0.0
  %787 = vmatpush1.msra.mxu0 0.0
  %788 = vmatprep.subr.mxu0 0.0
  %789 = vmatpush1.msra.mxu0 0.0
  %790 = vmatprep.subr.mxu0 0.0
  %791 = vmatpush1.msra.mxu0 0.0
  %792 = vmatprep.subr.mxu0 0.0
  %793 = vmatpush1.msra.mxu0 0.0
  %794 = vmatprep.subr.mxu0 0.0
  %795 = vmatpush1.msra.mxu0 0.0
  %796 = vmatprep.subr.mxu0 0.0
  %797 = vmatpush1.msra.mxu0 0.0
  %798 = vmatprep.subr.mxu0 0.0
  %799 = vmatpush1.msra.mxu0 0.0
  %800 = vmatprep.subr.mxu0 0.0
  %801 = vmatpush1.msra.mxu0 0.0
  %802 = vmatprep.subr.mxu0 0.0
  %803 = vmatpush1.msra.mxu0 0.0
  %804 = vmatprep.subr.mxu0 0.0
  %805 = vmatpush1.msra.mxu0 0.0
  %806 = vmatprep.subr.mxu0 0.0
  %807 = vmatpush1.msra.mxu0 0.0
  %808 = vmatprep.subr.mxu0 0.0
  %809 = vmatpush1.msra.mxu0 0.0
  %810 = vmatprep.subr.mxu0 0.0
  %811 = vmatpush1.msra.mxu0 0.0
  %812 = vmatprep.subr.mxu0 0.0
  %813 = vmatpush1.msra.mxu0 0.0
  %814 = vmatprep.subr.mxu0 0.0
  %815 = vmatpush1.msra.mxu0 0.0
  %816 = vmatprep.subr.mxu0 0.0
  %817 = vmatpush1.msra.mxu0 0.0
  %818 = vmatprep.subr.mxu0 0.0
  %819 = vmatpush1.msra.mxu0 0.0
  %820 = vmatprep.mubr.f32.mxu0 0.0
  %821 = vmatmul.mubr.f32.gmra.mrb[0].mxu0 %v752
  %v822 = vpop.f32.mrb[0].mxu0
  %v823 = vadd.f32 0.0, %v822
  %v824 = vpop.f32.mrb[0].mxu0
  %825 = vmatprep.mubr.f32.mxu0 0.0
  %826 = vmatmul.mubr.f32.gmra.mrb[0].mxu0 %v754
  %v827 = vpop.f32.mrb[0].mxu0
  %v828 = vadd.f32 0.0, %v827
  %v829 = vpop.f32.mrb[0].mxu0
  %830 = vdwg.mxu0
  %831 = vrot.lane.b32.xlu0 %v314, 112
  %v832 = vpop.permute.xlu0 %831
  %833 = vrot.lane.b32.xlu0 %v315, 112
  %v834 = vpop.permute.xlu0 %833
  %836 = vrot.lane.b32.xlu0 %v268, 112
  %v837 = vpop.permute.xlu0 %836
  %v839 = vsel %vm328, %v832, 0
  %v841 = vsel %vm328, %v834, 0
  %843 = vmatprep.subr.mxu0 0.0
  %844 = vmatpush1.msra.mxu0 %v837
  %845 = vmatprep.subr.mxu0 0.0
  %846 = vmatpush1.msra.mxu0 0.0
  %847 = vmatprep.subr.mxu0 0.0
  %848 = vmatpush1.msra.mxu0 0.0
  %849 = vmatprep.subr.mxu0 0.0
  %850 = vmatpush1.msra.mxu0 0.0
  %851 = vmatprep.subr.mxu0 0.0
  %852 = vmatpush1.msra.mxu0 0.0
  %853 = vmatprep.subr.mxu0 0.0
  %854 = vmatpush1.msra.mxu0 0.0
  %855 = vmatprep.subr.mxu0 0.0
  %856 = vmatpush1.msra.mxu0 0.0
  %857 = vmatprep.subr.mxu0 0.0
  %858 = vmatpush1.msra.mxu0 0.0
  %859 = vmatprep.subr.mxu0 0.0
  %860 = vmatpush1.msra.mxu0 0.0
  %861 = vmatprep.subr.mxu0 0.0
  %862 = vmatpush1.msra.mxu0 0.0
  %863 = vmatprep.subr.mxu0 0.0
  %864 = vmatpush1.msra.mxu0 0.0
  %865 = vmatprep.subr.mxu0 0.0
  %866 = vmatpush1.msra.mxu0 0.0
  %867 = vmatprep.subr.mxu0 0.0
  %868 = vmatpush1.msra.mxu0 0.0
  %869 = vmatprep.subr.mxu0 0.0
  %870 = vmatpush1.msra.mxu0 0.0
  %871 = vmatprep.subr.mxu0 0.0
  %872 = vmatpush1.msra.mxu0 0.0
  %873 = vmatprep.subr.mxu0 0.0
  %874 = vmatpush1.msra.mxu0 0.0
  %875 = vmatprep.subr.mxu0 0.0
  %876 = vmatpush1.msra.mxu0 0.0
  %877 = vmatprep.subr.mxu0 0.0
  %878 = vmatpush1.msra.mxu0 0.0
  %879 = vmatprep.subr.mxu0 0.0
  %880 = vmatpush1.msra.mxu0 0.0
  %881 = vmatprep.subr.mxu0 0.0
  %882 = vmatpush1.msra.mxu0 0.0
  %883 = vmatprep.subr.mxu0 0.0
  %884 = vmatpush1.msra.mxu0 0.0
  %885 = vmatprep.subr.mxu0 0.0
  %886 = vmatpush1.msra.mxu0 0.0
  %887 = vmatprep.subr.mxu0 0.0
  %888 = vmatpush1.msra.mxu0 0.0
  %889 = vmatprep.subr.mxu0 0.0
  %890 = vmatpush1.msra.mxu0 0.0
  %891 = vmatprep.subr.mxu0 0.0
  %892 = vmatpush1.msra.mxu0 0.0
  %893 = vmatprep.subr.mxu0 0.0
  %894 = vmatpush1.msra.mxu0 0.0
  %895 = vmatprep.subr.mxu0 0.0
  %896 = vmatpush1.msra.mxu0 0.0
  %897 = vmatprep.subr.mxu0 0.0
  %898 = vmatpush1.msra.mxu0 0.0
  %899 = vmatprep.subr.mxu0 0.0
  %900 = vmatpush1.msra.mxu0 0.0
  %901 = vmatprep.subr.mxu0 0.0
  %902 = vmatpush1.msra.mxu0 0.0
  %903 = vmatprep.subr.mxu0 0.0
  %904 = vmatpush1.msra.mxu0 0.0
  %905 = vmatprep.subr.mxu0 0.0
  %906 = vmatpush1.msra.mxu0 0.0
  %907 = vmatprep.mubr.f32.mxu0 0.0
  %908 = vmatmul.mubr.f32.gmra.mrb[0].mxu0 %v839
  %v909 = vpop.f32.mrb[0].mxu0
  %v910 = vadd.f32 0.0, %v909
  %v911 = vpop.f32.mrb[0].mxu0
  %912 = vmatprep.mubr.f32.mxu0 0.0
  %913 = vmatmul.mubr.f32.gmra.mrb[0].mxu0 %v841
  %v914 = vpop.f32.mrb[0].mxu0
  %v915 = vadd.f32 0.0, %v914
  %v916 = vpop.f32.mrb[0].mxu0
  %917 = vdwg.mxu0
  %918 = vrot.lane.b32.xlu0 %v314, 104
  %v919 = vpop.permute.xlu0 %918
  %920 = vrot.lane.b32.xlu0 %v315, 104
  %v921 = vpop.permute.xlu0 %920
  %923 = vrot.lane.b32.xlu0 %v273, 112
  %v924 = vpop.permute.xlu0 %923
  %v926 = vsel %vm328, %v919, 0
  %v928 = vsel %vm328, %v921, 0
  %930 = vmatprep.subr.mxu0 0.0
  %931 = vmatpush1.msra.mxu0 %v924
  %932 = vmatprep.subr.mxu0 0.0
  %933 = vmatpush1.msra.mxu0 0.0
  %934 = vmatprep.subr.mxu0 0.0
  %935 = vmatpush1.msra.mxu0 0.0
  %936 = vmatprep.subr.mxu0 0.0
  %937 = vmatpush1.msra.mxu0 0.0
  %938 = vmatprep.subr.mxu0 0.0
  %939 = vmatpush1.msra.mxu0 0.0
  %940 = vmatprep.subr.mxu0 0.0
  %941 = vmatpush1.msra.mxu0 0.0
  %942 = vmatprep.subr.mxu0 0.0
  %943 = vmatpush1.msra.mxu0 0.0
  %944 = vmatprep.subr.mxu0 0.0
  %945 = vmatpush1.msra.mxu0 0.0
  %946 = vmatprep.subr.mxu0 0.0
  %947 = vmatpush1.msra.mxu0 0.0
  %948 = vmatprep.subr.mxu0 0.0
  %949 = vmatpush1.msra.mxu0 0.0
  %950 = vmatprep.subr.mxu0 0.0
  %951 = vmatpush1.msra.mxu0 0.0
  %952 = vmatprep.subr.mxu0 0.0
  %953 = vmatpush1.msra.mxu0 0.0
  %954 = vmatprep.subr.mxu0 0.0
  %955 = vmatpush1.msra.mxu0 0.0
  %956 = vmatprep.subr.mxu0 0.0
  %957 = vmatpush1.msra.mxu0 0.0
  %958 = vmatprep.subr.mxu0 0.0
  %959 = vmatpush1.msra.mxu0 0.0
  %960 = vmatprep.subr.mxu0 0.0
  %961 = vmatpush1.msra.mxu0 0.0
  %962 = vmatprep.subr.mxu0 0.0
  %963 = vmatpush1.msra.mxu0 0.0
  %964 = vmatprep.subr.mxu0 0.0
  %965 = vmatpush1.msra.mxu0 0.0
  %966 = vmatprep.subr.mxu0 0.0
  %967 = vmatpush1.msra.mxu0 0.0
  %968 = vmatprep.subr.mxu0 0.0
  %969 = vmatpush1.msra.mxu0 0.0
  %970 = vmatprep.subr.mxu0 0.0
  %971 = vmatpush1.msra.mxu0 0.0
  %972 = vmatprep.subr.mxu0 0.0
  %973 = vmatpush1.msra.mxu0 0.0
  %974 = vmatprep.subr.mxu0 0.0
  %975 = vmatpush1.msra.mxu0 0.0
  %976 = vmatprep.subr.mxu0 0.0
  %977 = vmatpush1.msra.mxu0 0.0
  %978 = vmatprep.subr.mxu0 0.0
  %979 = vmatpush1.msra.mxu0 0.0
  %980 = vmatprep.subr.mxu0 0.0
  %981 = vmatpush1.msra.mxu0 0.0
  %982 = vmatprep.subr.mxu0 0.0
  %983 = vmatpush1.msra.mxu0 0.0
  %984 = vmatprep.subr.mxu0 0.0
  %985 = vmatpush1.msra.mxu0 0.0
  %986 = vmatprep.subr.mxu0 0.0
  %987 = vmatpush1.msra.mxu0 0.0
  %988 = vmatprep.subr.mxu0 0.0
  %989 = vmatpush1.msra.mxu0 0.0
  %990 = vmatprep.subr.mxu0 0.0
  %991 = vmatpush1.msra.mxu0 0.0
  %992 = vmatprep.subr.mxu0 0.0
  %993 = vmatpush1.msra.mxu0 0.0
  %994 = vmatprep.mubr.f32.mxu0 0.0
  %995 = vmatmul.mubr.f32.gmra.mrb[0].mxu0 %v926
  %v996 = vpop.f32.mrb[0].mxu0
  %v997 = vadd.f32 0.0, %v996
  %v998 = vpop.f32.mrb[0].mxu0
  %999 = vmatprep.mubr.f32.mxu0 0.0
  %1000 = vmatmul.mubr.f32.gmra.mrb[0].mxu0 %v928
  %v1001 = vpop.f32.mrb[0].mxu0
  %v1002 = vadd.f32 0.0, %v1001
  %v1003 = vpop.f32.mrb[0].mxu0
  %1004 = vdwg.mxu0
  %v1005 = vsel %vm45, %v402, -inf
  %1006 = vmax.xlane.f32.xlu0 %v1005
  %v1007 = vpop.xlane.xlu0 %1006
  %v1008 = vsel %vm45, %v407, -inf
  %1009 = vmax.xlane.f32.xlu0 %v1008
  %v1010 = vpop.xlane.xlu0 %1009
  %v1011 = vsel %vm45, %v485, -inf
  %1012 = vmax.xlane.f32.xlu0 %v1011
  %v1013 = vpop.xlane.xlu0 %1012
  %v1014 = vsel %vm45, %v490, -inf
  %1015 = vmax.xlane.f32.xlu0 %v1014
  %v1016 = vpop.xlane.xlu0 %1015
  %v1017 = vsel %vm45, %v568, -inf
  %1018 = vmax.xlane.f32.xlu0 %v1017
  %v1019 = vpop.xlane.xlu0 %1018
  %v1020 = vsel %vm45, %v573, -inf
  %1021 = vmax.xlane.f32.xlu0 %v1020
  %v1022 = vpop.xlane.xlu0 %1021
  %v1023 = vsel %vm45, %v651, -inf
  %1024 = vmax.xlane.f32.xlu0 %v1023
  %v1025 = vpop.xlane.xlu0 %1024
  %v1026 = vsel %vm45, %v656, -inf
  %1027 = vmax.xlane.f32.xlu0 %v1026
  %v1028 = vpop.xlane.xlu0 %1027
  %v1029 = vsel %vm45, %v736, -inf
  %1030 = vmax.xlane.f32.xlu0 %v1029
  %v1031 = vpop.xlane.xlu0 %1030
  %v1032 = vsel %vm45, %v741, -inf
  %1033 = vmax.xlane.f32.xlu0 %v1032
  %v1034 = vpop.xlane.xlu0 %1033
  %v1035 = vsel %vm45, %v823, -inf
  %1036 = vmax.xlane.f32.xlu0 %v1035
  %v1037 = vpop.xlane.xlu0 %1036
  %v1038 = vsel %vm45, %v828, -inf
  %1039 = vmax.xlane.f32.xlu0 %v1038
  %v1040 = vpop.xlane.xlu0 %1039
  %v1041 = vsel %vm45, %v910, -inf
  %1042 = vmax.xlane.f32.xlu0 %v1041
  %v1043 = vpop.xlane.xlu0 %1042
  %v1044 = vsel %vm45, %v915, -inf
  %1045 = vmax.xlane.f32.xlu0 %v1044
  %v1046 = vpop.xlane.xlu0 %1045
  %v1047 = vsel %vm45, %v997, -inf
  %1048 = vmax.xlane.f32.xlu0 %v1047
  %v1049 = vpop.xlane.xlu0 %1048
  %v1050 = vsel %vm45, %v1002, -inf
  %1051 = vmax.xlane.f32.xlu0 %v1050
  %v1052 = vpop.xlane.xlu0 %1051
  %v1053 = vsub.f32 %v402, %v1007
  %v1054 = vsub.f32 %v407, %v1010
  %v1055 = vsub.f32 %v485, %v1013
  %v1056 = vsub.f32 %v490, %v1016
  %v1057 = vsub.f32 %v568, %v1019
  %v1058 = vsub.f32 %v573, %v1022
  %v1059 = vsub.f32 %v651, %v1025
  %v1060 = vsub.f32 %v656, %v1028
  %v1061 = vsub.f32 %v736, %v1031
  %v1062 = vsub.f32 %v741, %v1034
  %v1063 = vsub.f32 %v823, %v1037
  %v1064 = vsub.f32 %v828, %v1040
  %v1065 = vsub.f32 %v910, %v1043
  %v1066 = vsub.f32 %v915, %v1046
  %v1067 = vsub.f32 %v997, %v1049
  %v1068 = vsub.f32 %v1002, %v1052
  %v1069 = vmul.f32 %v1053, 1.442695
  %v1070 = vpow.pop %v1069
  %v1071 = vmul.f32 %v1054, 1.442695
  %v1072 = vpow.pop %v1071
  %v1073 = vmul.f32 %v1055, 1.442695
  %v1074 = vpow.pop %v1073
  %v1075 = vmul.f32 %v1056, 1.442695
  %v1076 = vpow.pop %v1075
  %v1077 = vmul.f32 %v1057, 1.442695
  %v1078 = vpow.pop %v1077
  %v1079 = vmul.f32 %v1058, 1.442695
  %v1080 = vpow.pop %v1079
  %v1081 = vmul.f32 %v1059, 1.442695
  %v1082 = vpow.pop %v1081
  %v1083 = vmul.f32 %v1060, 1.442695
  %v1084 = vpow.pop %v1083
  %v1085 = vmul.f32 %v1061, 1.442695
  %v1086 = vpow.pop %v1085
  %v1087 = vmul.f32 %v1062, 1.442695
  %v1088 = vpow.pop %v1087
  %v1089 = vmul.f32 %v1063, 1.442695
  %v1090 = vpow.pop %v1089
  %v1091 = vmul.f32 %v1064, 1.442695
  %v1092 = vpow.pop %v1091
  %v1093 = vmul.f32 %v1065, 1.442695
  %v1094 = vpow.pop %v1093
  %v1095 = vmul.f32 %v1066, 1.442695
  %v1096 = vpow.pop %v1095
  %v1097 = vmul.f32 %v1067, 1.442695
  %v1098 = vpow.pop %v1097
  %v1099 = vmul.f32 %v1068, 1.442695
  %v1100 = vpow.pop %v1099
  %v1101 = vsel %vm45, %v1070, 0.0
  %1102 = vadd.xlane.f32.xlu0 %v1101
  %v1103 = vpop.xlane.xlu0 %1102
  %v1104 = vsel %vm45, %v1072, 0.0
  %1105 = vadd.xlane.f32.xlu0 %v1104
  %v1106 = vpop.xlane.xlu0 %1105
  %v1107 = vsel %vm45, %v1074, 0.0
  %1108 = vadd.xlane.f32.xlu0 %v1107
  %v1109 = vpop.xlane.xlu0 %1108
  %v1110 = vsel %vm45, %v1076, 0.0
  %1111 = vadd.xlane.f32.xlu0 %v1110
  %v1112 = vpop.xlane.xlu0 %1111
  %v1113 = vsel %vm45, %v1078, 0.0
  %1114 = vadd.xlane.f32.xlu0 %v1113
  %v1115 = vpop.xlane.xlu0 %1114
  %v1116 = vsel %vm45, %v1080, 0.0
  %1117 = vadd.xlane.f32.xlu0 %v1116
  %v1118 = vpop.xlane.xlu0 %1117
  %v1119 = vsel %vm45, %v1082, 0.0
  %1120 = vadd.xlane.f32.xlu0 %v1119
  %v1121 = vpop.xlane.xlu0 %1120
  %v1122 = vsel %vm45, %v1084, 0.0
  %1123 = vadd.xlane.f32.xlu0 %v1122
  %v1124 = vpop.xlane.xlu0 %1123
  %v1125 = vsel %vm45, %v1086, 0.0
  %1126 = vadd.xlane.f32.xlu0 %v1125
  %v1127 = vpop.xlane.xlu0 %1126
  %v1128 = vsel %vm45, %v1088, 0.0
  %1129 = vadd.xlane.f32.xlu0 %v1128
  %v1130 = vpop.xlane.xlu0 %1129
  %v1131 = vsel %vm45, %v1090, 0.0
  %1132 = vadd.xlane.f32.xlu0 %v1131
  %v1133 = vpop.xlane.xlu0 %1132
  %v1134 = vsel %vm45, %v1092, 0.0
  %1135 = vadd.xlane.f32.xlu0 %v1134
  %v1136 = vpop.xlane.xlu0 %1135
  %v1137 = vsel %vm45, %v1094, 0.0
  %1138 = vadd.xlane.f32.xlu0 %v1137
  %v1139 = vpop.xlane.xlu0 %1138
  %v1140 = vsel %vm45, %v1096, 0.0
  %1141 = vadd.xlane.f32.xlu0 %v1140
  %v1142 = vpop.xlane.xlu0 %1141
  %v1143 = vsel %vm45, %v1098, 0.0
  %1144 = vadd.xlane.f32.xlu0 %v1143
  %v1145 = vpop.xlane.xlu0 %1144
  %v1146 = vsel %vm45, %v1100, 0.0
  %1147 = vadd.xlane.f32.xlu0 %v1146
  %v1148 = vpop.xlane.xlu0 %1147
  %v1149 = vrcp.pop %v1103
  %v1150 = vrcp.pop %v1106
  %v1151 = vrcp.pop %v1109
  %v1152 = vrcp.pop %v1112
  %v1153 = vrcp.pop %v1115
  %v1154 = vrcp.pop %v1118
  %v1155 = vrcp.pop %v1121
  %v1156 = vrcp.pop %v1124
  %v1157 = vrcp.pop %v1127
  %v1158 = vrcp.pop %v1130
  %v1159 = vrcp.pop %v1133
  %v1160 = vrcp.pop %v1136
  %v1161 = vrcp.pop %v1139
  %v1162 = vrcp.pop %v1142
  %v1163 = vrcp.pop %v1145
  %v1164 = vrcp.pop %v1148
  %v1165 = vmul.f32 %v1070, %v1149
  %v1166 = vmul.f32 %v1072, %v1150
  %v1167 = vmul.f32 %v1074, %v1151
  %v1168 = vmul.f32 %v1076, %v1152
  %v1169 = vmul.f32 %v1078, %v1153
  %v1170 = vmul.f32 %v1080, %v1154
  %v1171 = vmul.f32 %v1082, %v1155
  %v1172 = vmul.f32 %v1084, %v1156
  %v1173 = vmul.f32 %v1086, %v1157
  %v1174 = vmul.f32 %v1088, %v1158
  %v1175 = vmul.f32 %v1090, %v1159
  %v1176 = vmul.f32 %v1092, %v1160
  %v1177 = vmul.f32 %v1094, %v1161
  %v1178 = vmul.f32 %v1096, %v1162
  %v1179 = vmul.f32 %v1098, %v1163
  %v1180 = vmul.f32 %v1100, %v1164
  %v1182 = vsel %vm45, %v278, 0
  %v1185 = vsel %vm45, %v1165, 0
  %v1188 = vsel %vm45, %v1166, 0
  %1190 = vmatprep.subr.mxu0 0.0
  %1191 = vmatpush1.xpose.msra.mxu0 %v1185
  %1192 = vmatprep.subr.mxu0 0.0
  %1193 = vmatpush1.xpose.msra.mxu0 %v1188
  %1194 = vmatprep.subr.mxu0 0.0
  %1195 = vmatpush1.xpose.msra.mxu0 0.0
  %1196 = vmatprep.subr.mxu0 0.0
  %1197 = vmatpush1.xpose.msra.mxu0 0.0
  %1198 = vmatprep.subr.mxu0 0.0
  %1199 = vmatpush1.xpose.msra.mxu0 0.0
  %1200 = vmatprep.subr.mxu0 0.0
  %1201 = vmatpush1.xpose.msra.mxu0 0.0
  %1202 = vmatprep.subr.mxu0 0.0
  %1203 = vmatpush1.xpose.msra.mxu0 0.0
  %1204 = vmatprep.subr.mxu0 0.0
  %1205 = vmatpush1.xpose.msra.mxu0 0.0
  %1206 = vmatprep.subr.mxu0 0.0
  %1207 = vmatpush1.xpose.msra.mxu0 0.0
  %1208 = vmatprep.subr.mxu0 0.0
  %1209 = vmatpush1.xpose.msra.mxu0 0.0
  %1210 = vmatprep.subr.mxu0 0.0
  %1211 = vmatpush1.xpose.msra.mxu0 0.0
  %1212 = vmatprep.subr.mxu0 0.0
  %1213 = vmatpush1.xpose.msra.mxu0 0.0
  %1214 = vmatprep.subr.mxu0 0.0
  %1215 = vmatpush1.xpose.msra.mxu0 0.0
  %1216 = vmatprep.subr.mxu0 0.0
  %1217 = vmatpush1.xpose.msra.mxu0 0.0
  %1218 = vmatprep.subr.mxu0 0.0
  %1219 = vmatpush1.xpose.msra.mxu0 0.0
  %1220 = vmatprep.subr.mxu0 0.0
  %1221 = vmatpush1.xpose.msra.mxu0 0.0
  %1222 = vmatprep.subr.mxu0 0.0
  %1223 = vmatpush1.xpose.msra.mxu0 0.0
  %1224 = vmatprep.subr.mxu0 0.0
  %1225 = vmatpush1.xpose.msra.mxu0 0.0
  %1226 = vmatprep.subr.mxu0 0.0
  %1227 = vmatpush1.xpose.msra.mxu0 0.0
  %1228 = vmatprep.subr.mxu0 0.0
  %1229 = vmatpush1.xpose.msra.mxu0 0.0
  %1230 = vmatprep.subr.mxu0 0.0
  %1231 = vmatpush1.xpose.msra.mxu0 0.0
  %1232 = vmatprep.subr.mxu0 0.0
  %1233 = vmatpush1.xpose.msra.mxu0 0.0
  %1234 = vmatprep.subr.mxu0 0.0
  %1235 = vmatpush1.xpose.msra.mxu0 0.0
  %1236 = vmatprep.subr.mxu0 0.0
  %1237 = vmatpush1.xpose.msra.mxu0 0.0
  %1238 = vmatprep.subr.mxu0 0.0
  %1239 = vmatpush1.xpose.msra.mxu0 0.0
  %1240 = vmatprep.subr.mxu0 0.0
  %1241 = vmatpush1.xpose.msra.mxu0 0.0
  %1242 = vmatprep.subr.mxu0 0.0
  %1243 = vmatpush1.xpose.msra.mxu0 0.0
  %1244 = vmatprep.subr.mxu0 0.0
  %1245 = vmatpush1.xpose.msra.mxu0 0.0
  %1246 = vmatprep.subr.mxu0 0.0
  %1247 = vmatpush1.xpose.msra.mxu0 0.0
  %1248 = vmatprep.subr.mxu0 0.0
  %1249 = vmatpush1.xpose.msra.mxu0 0.0
  %1250 = vmatprep.subr.mxu0 0.0
  %1251 = vmatpush1.xpose.msra.mxu0 0.0
  %1252 = vmatprep.subr.mxu0 0.0
  %1253 = vmatpush1.xpose.msra.mxu0 0.0
  %1254 = vmatprep.mubr.f32.mxu0 0.0
  %1255 = vmatmul.mubr.f32.gmra.mrb[0].mxu0 %v1182
  %v1256 = vpop.f32.mrb[0].mxu0
  %v1257 = vadd.f32 0.0, %v1256
  %v1258 = vpop.f32.mrb[0].mxu0
  %1259 = vdwg.mxu0
  %v1261 = vsel %vm45, %v283, 0
  %v1264 = vsel %vm45, %v1167, 0
  %v1267 = vsel %vm45, %v1168, 0
  %1269 = vmatprep.subr.mxu0 0.0
  %1270 = vmatpush1.xpose.msra.mxu0 %v1264
  %1271 = vmatprep.subr.mxu0 0.0
  %1272 = vmatpush1.xpose.msra.mxu0 %v1267
  %1273 = vmatprep.subr.mxu0 0.0
  %1274 = vmatpush1.xpose.msra.mxu0 0.0
  %1275 = vmatprep.subr.mxu0 0.0
  %1276 = vmatpush1.xpose.msra.mxu0 0.0
  %1277 = vmatprep.subr.mxu0 0.0
  %1278 = vmatpush1.xpose.msra.mxu0 0.0
  %1279 = vmatprep.subr.mxu0 0.0
  %1280 = vmatpush1.xpose.msra.mxu0 0.0
  %1281 = vmatprep.subr.mxu0 0.0
  %1282 = vmatpush1.xpose.msra.mxu0 0.0
  %1283 = vmatprep.subr.mxu0 0.0
  %1284 = vmatpush1.xpose.msra.mxu0 0.0
  %1285 = vmatprep.subr.mxu0 0.0
  %1286 = vmatpush1.xpose.msra.mxu0 0.0
  %1287 = vmatprep.subr.mxu0 0.0
  %1288 = vmatpush1.xpose.msra.mxu0 0.0
  %1289 = vmatprep.subr.mxu0 0.0
  %1290 = vmatpush1.xpose.msra.mxu0 0.0
  %1291 = vmatprep.subr.mxu0 0.0
  %1292 = vmatpush1.xpose.msra.mxu0 0.0
  %1293 = vmatprep.subr.mxu0 0.0
  %1294 = vmatpush1.xpose.msra.mxu0 0.0
  %1295 = vmatprep.subr.mxu0 0.0
  %1296 = vmatpush1.xpose.msra.mxu0 0.0
  %1297 = vmatprep.subr.mxu0 0.0
  %1298 = vmatpush1.xpose.msra.mxu0 0.0
  %1299 = vmatprep.subr.mxu0 0.0
  %1300 = vmatpush1.xpose.msra.mxu0 0.0
  %1301 = vmatprep.subr.mxu0 0.0
  %1302 = vmatpush1.xpose.msra.mxu0 0.0
  %1303 = vmatprep.subr.mxu0 0.0
  %1304 = vmatpush1.xpose.msra.mxu0 0.0
  %1305 = vmatprep.subr.mxu0 0.0
  %1306 = vmatpush1.xpose.msra.mxu0 0.0
  %1307 = vmatprep.subr.mxu0 0.0
  %1308 = vmatpush1.xpose.msra.mxu0 0.0
  %1309 = vmatprep.subr.mxu0 0.0
  %1310 = vmatpush1.xpose.msra.mxu0 0.0
  %1311 = vmatprep.subr.mxu0 0.0
  %1312 = vmatpush1.xpose.msra.mxu0 0.0
  %1313 = vmatprep.subr.mxu0 0.0
  %1314 = vmatpush1.xpose.msra.mxu0 0.0
  %1315 = vmatprep.subr.mxu0 0.0
  %1316 = vmatpush1.xpose.msra.mxu0 0.0
  %1317 = vmatprep.subr.mxu0 0.0
  %1318 = vmatpush1.xpose.msra.mxu0 0.0
  %1319 = vmatprep.subr.mxu0 0.0
  %1320 = vmatpush1.xpose.msra.mxu0 0.0
  %1321 = vmatprep.subr.mxu0 0.0
  %1322 = vmatpush1.xpose.msra.mxu0 0.0
  %1323 = vmatprep.subr.mxu0 0.0
  %1324 = vmatpush1.xpose.msra.mxu0 0.0
  %1325 = vmatprep.subr.mxu0 0.0
  %1326 = vmatpush1.xpose.msra.mxu0 0.0
  %1327 = vmatprep.subr.mxu0 0.0
  %1328 = vmatpush1.xpose.msra.mxu0 0.0
  %1329 = vmatprep.subr.mxu0 0.0
  %1330 = vmatpush1.xpose.msra.mxu0 0.0
  %1331 = vmatprep.subr.mxu0 0.0
  %1332 = vmatpush1.xpose.msra.mxu0 0.0
  %1333 = vmatprep.mubr.f32.mxu0 0.0
  %1334 = vmatmul.mubr.f32.gmra.mrb[0].mxu0 %v1261
  %v1335 = vpop.f32.mrb[0].mxu0
  %v1336 = vadd.f32 0.0, %v1335
  %v1337 = vpop.f32.mrb[0].mxu0
  %1338 = vdwg.mxu0
  %v1340 = vsel %vm45, %v288, 0
  %v1343 = vsel %vm45, %v1169, 0
  %v1346 = vsel %vm45, %v1170, 0
  %1348 = vmatprep.subr.mxu0 0.0
  %1349 = vmatpush1.xpose.msra.mxu0 %v1343
  %1350 = vmatprep.subr.mxu0 0.0
  %1351 = vmatpush1.xpose.msra.mxu0 %v1346
  %1352 = vmatprep.subr.mxu0 0.0
  %1353 = vmatpush1.xpose.msra.mxu0 0.0
  %1354 = vmatprep.subr.mxu0 0.0
  %1355 = vmatpush1.xpose.msra.mxu0 0.0
  %1356 = vmatprep.subr.mxu0 0.0
  %1357 = vmatpush1.xpose.msra.mxu0 0.0
  %1358 = vmatprep.subr.mxu0 0.0
  %1359 = vmatpush1.xpose.msra.mxu0 0.0
  %1360 = vmatprep.subr.mxu0 0.0
  %1361 = vmatpush1.xpose.msra.mxu0 0.0
  %1362 = vmatprep.subr.mxu0 0.0
  %1363 = vmatpush1.xpose.msra.mxu0 0.0
  %1364 = vmatprep.subr.mxu0 0.0
  %1365 = vmatpush1.xpose.msra.mxu0 0.0
  %1366 = vmatprep.subr.mxu0 0.0
  %1367 = vmatpush1.xpose.msra.mxu0 0.0
  %1368 = vmatprep.subr.mxu0 0.0
  %1369 = vmatpush1.xpose.msra.mxu0 0.0
  %1370 = vmatprep.subr.mxu0 0.0
  %1371 = vmatpush1.xpose.msra.mxu0 0.0
  %1372 = vmatprep.subr.mxu0 0.0
  %1373 = vmatpush1.xpose.msra.mxu0 0.0
  %1374 = vmatprep.subr.mxu0 0.0
  %1375 = vmatpush1.xpose.msra.mxu0 0.0
  %1376 = vmatprep.subr.mxu0 0.0
  %1377 = vmatpush1.xpose.msra.mxu0 0.0
  %1378 = vmatprep.subr.mxu0 0.0
  %1379 = vmatpush1.xpose.msra.mxu0 0.0
  %1380 = vmatprep.subr.mxu0 0.0
  %1381 = vmatpush1.xpose.msra.mxu0 0.0
  %1382 = vmatprep.subr.mxu0 0.0
  %1383 = vmatpush1.xpose.msra.mxu0 0.0
  %1384 = vmatprep.subr.mxu0 0.0
  %1385 = vmatpush1.xpose.msra.mxu0 0.0
  %1386 = vmatprep.subr.mxu0 0.0
  %1387 = vmatpush1.xpose.msra.mxu0 0.0
  %1388 = vmatprep.subr.mxu0 0.0
  %1389 = vmatpush1.xpose.msra.mxu0 0.0
  %1390 = vmatprep.subr.mxu0 0.0
  %1391 = vmatpush1.xpose.msra.mxu0 0.0
  %1392 = vmatprep.subr.mxu0 0.0
  %1393 = vmatpush1.xpose.msra.mxu0 0.0
  %1394 = vmatprep.subr.mxu0 0.0
  %1395 = vmatpush1.xpose.msra.mxu0 0.0
  %1396 = vmatprep.subr.mxu0 0.0
  %1397 = vmatpush1.xpose.msra.mxu0 0.0
  %1398 = vmatprep.subr.mxu0 0.0
  %1399 = vmatpush1.xpose.msra.mxu0 0.0
  %1400 = vmatprep.subr.mxu0 0.0
  %1401 = vmatpush1.xpose.msra.mxu0 0.0
  %1402 = vmatprep.subr.mxu0 0.0
  %1403 = vmatpush1.xpose.msra.mxu0 0.0
  %1404 = vmatprep.subr.mxu0 0.0
  %1405 = vmatpush1.xpose.msra.mxu0 0.0
  %1406 = vmatprep.subr.mxu0 0.0
  %1407 = vmatpush1.xpose.msra.mxu0 0.0
  %1408 = vmatprep.subr.mxu0 0.0
  %1409 = vmatpush1.xpose.msra.mxu0 0.0
  %1410 = vmatprep.subr.mxu0 0.0
  %1411 = vmatpush1.xpose.msra.mxu0 0.0
  %1412 = vmatprep.mubr.f32.mxu0 0.0
  %1413 = vmatmul.mubr.f32.gmra.mrb[0].mxu0 %v1340
  %v1414 = vpop.f32.mrb[0].mxu0
  %v1415 = vadd.f32 0.0, %v1414
  %v1416 = vpop.f32.mrb[0].mxu0
  %1417 = vdwg.mxu0
  %v1419 = vsel %vm45, %v293, 0
  %v1422 = vsel %vm45, %v1171, 0
  %v1425 = vsel %vm45, %v1172, 0
  %1427 = vmatprep.subr.mxu0 0.0
  %1428 = vmatpush1.xpose.msra.mxu0 %v1422
  %1429 = vmatprep.subr.mxu0 0.0
  %1430 = vmatpush1.xpose.msra.mxu0 %v1425
  %1431 = vmatprep.subr.mxu0 0.0
  %1432 = vmatpush1.xpose.msra.mxu0 0.0
  %1433 = vmatprep.subr.mxu0 0.0
  %1434 = vmatpush1.xpose.msra.mxu0 0.0
  %1435 = vmatprep.subr.mxu0 0.0
  %1436 = vmatpush1.xpose.msra.mxu0 0.0
  %1437 = vmatprep.subr.mxu0 0.0
  %1438 = vmatpush1.xpose.msra.mxu0 0.0
  %1439 = vmatprep.subr.mxu0 0.0
  %1440 = vmatpush1.xpose.msra.mxu0 0.0
  %1441 = vmatprep.subr.mxu0 0.0
  %1442 = vmatpush1.xpose.msra.mxu0 0.0
  %1443 = vmatprep.subr.mxu0 0.0
  %1444 = vmatpush1.xpose.msra.mxu0 0.0
  %1445 = vmatprep.subr.mxu0 0.0
  %1446 = vmatpush1.xpose.msra.mxu0 0.0
  %1447 = vmatprep.subr.mxu0 0.0
  %1448 = vmatpush1.xpose.msra.mxu0 0.0
  %1449 = vmatprep.subr.mxu0 0.0
  %1450 = vmatpush1.xpose.msra.mxu0 0.0
  %1451 = vmatprep.subr.mxu0 0.0
  %1452 = vmatpush1.xpose.msra.mxu0 0.0
  %1453 = vmatprep.subr.mxu0 0.0
  %1454 = vmatpush1.xpose.msra.mxu0 0.0
  %1455 = vmatprep.subr.mxu0 0.0
  %1456 = vmatpush1.xpose.msra.mxu0 0.0
  %1457 = vmatprep.subr.mxu0 0.0
  %1458 = vmatpush1.xpose.msra.mxu0 0.0
  %1459 = vmatprep.subr.mxu0 0.0
  %1460 = vmatpush1.xpose.msra.mxu0 0.0
  %1461 = vmatprep.subr.mxu0 0.0
  %1462 = vmatpush1.xpose.msra.mxu0 0.0
  %1463 = vmatprep.subr.mxu0 0.0
  %1464 = vmatpush1.xpose.msra.mxu0 0.0
  %1465 = vmatprep.subr.mxu0 0.0
  %1466 = vmatpush1.xpose.msra.mxu0 0.0
  %1467 = vmatprep.subr.mxu0 0.0
  %1468 = vmatpush1.xpose.msra.mxu0 0.0
  %1469 = vmatprep.subr.mxu0 0.0
  %1470 = vmatpush1.xpose.msra.mxu0 0.0
  %1471 = vmatprep.subr.mxu0 0.0
  %1472 = vmatpush1.xpose.msra.mxu0 0.0
  %1473 = vmatprep.subr.mxu0 0.0
  %1474 = vmatpush1.xpose.msra.mxu0 0.0
  %1475 = vmatprep.subr.mxu0 0.0
  %1476 = vmatpush1.xpose.msra.mxu0 0.0
  %1477 = vmatprep.subr.mxu0 0.0
  %1478 = vmatpush1.xpose.msra.mxu0 0.0
  %1479 = vmatprep.subr.mxu0 0.0
  %1480 = vmatpush1.xpose.msra.mxu0 0.0
  %1481 = vmatprep.subr.mxu0 0.0
  %1482 = vmatpush1.xpose.msra.mxu0 0.0
  %1483 = vmatprep.subr.mxu0 0.0
  %1484 = vmatpush1.xpose.msra.mxu0 0.0
  %1485 = vmatprep.subr.mxu0 0.0
  %1486 = vmatpush1.xpose.msra.mxu0 0.0
  %1487 = vmatprep.subr.mxu0 0.0
  %1488 = vmatpush1.xpose.msra.mxu0 0.0
  %1489 = vmatprep.subr.mxu0 0.0
  %1490 = vmatpush1.xpose.msra.mxu0 0.0
  %1491 = vmatprep.mubr.f32.mxu0 0.0
  %1492 = vmatmul.mubr.f32.gmra.mrb[0].mxu0 %v1419
  %v1493 = vpop.f32.mrb[0].mxu0
  %v1494 = vadd.f32 0.0, %v1493
  %v1495 = vpop.f32.mrb[0].mxu0
  %1496 = vdwg.mxu0
  %1497 = vrot.lane.b32.xlu0 %v278, 112
  %v1498 = vpop.permute.xlu0 %1497
  %v1499 = vsel %vm45, %v1498, 0
  %v1502 = vsel %vm45, %v1173, 0
  %v1505 = vsel %vm45, %v1174, 0
  %1507 = vmatprep.subr.mxu0 0.0
  %1508 = vmatpush1.xpose.msra.mxu0 %v1502
  %1509 = vmatprep.subr.mxu0 0.0
  %1510 = vmatpush1.xpose.msra.mxu0 %v1505
  %1511 = vmatprep.subr.mxu0 0.0
  %1512 = vmatpush1.xpose.msra.mxu0 0.0
  %1513 = vmatprep.subr.mxu0 0.0
  %1514 = vmatpush1.xpose.msra.mxu0 0.0
  %1515 = vmatprep.subr.mxu0 0.0
  %1516 = vmatpush1.xpose.msra.mxu0 0.0
  %1517 = vmatprep.subr.mxu0 0.0
  %1518 = vmatpush1.xpose.msra.mxu0 0.0
  %1519 = vmatprep.subr.mxu0 0.0
  %1520 = vmatpush1.xpose.msra.mxu0 0.0
  %1521 = vmatprep.subr.mxu0 0.0
  %1522 = vmatpush1.xpose.msra.mxu0 0.0
  %1523 = vmatprep.subr.mxu0 0.0
  %1524 = vmatpush1.xpose.msra.mxu0 0.0
  %1525 = vmatprep.subr.mxu0 0.0
  %1526 = vmatpush1.xpose.msra.mxu0 0.0
  %1527 = vmatprep.subr.mxu0 0.0
  %1528 = vmatpush1.xpose.msra.mxu0 0.0
  %1529 = vmatprep.subr.mxu0 0.0
  %1530 = vmatpush1.xpose.msra.mxu0 0.0
  %1531 = vmatprep.subr.mxu0 0.0
  %1532 = vmatpush1.xpose.msra.mxu0 0.0
  %1533 = vmatprep.subr.mxu0 0.0
  %1534 = vmatpush1.xpose.msra.mxu0 0.0
  %1535 = vmatprep.subr.mxu0 0.0
  %1536 = vmatpush1.xpose.msra.mxu0 0.0
  %1537 = vmatprep.subr.mxu0 0.0
  %1538 = vmatpush1.xpose.msra.mxu0 0.0
  %1539 = vmatprep.subr.mxu0 0.0
  %1540 = vmatpush1.xpose.msra.mxu0 0.0
  %1541 = vmatprep.subr.mxu0 0.0
  %1542 = vmatpush1.xpose.msra.mxu0 0.0
  %1543 = vmatprep.subr.mxu0 0.0
  %1544 = vmatpush1.xpose.msra.mxu0 0.0
  %1545 = vmatprep.subr.mxu0 0.0
  %1546 = vmatpush1.xpose.msra.mxu0 0.0
  %1547 = vmatprep.subr.mxu0 0.0
  %1548 = vmatpush1.xpose.msra.mxu0 0.0
  %1549 = vmatprep.subr.mxu0 0.0
  %1550 = vmatpush1.xpose.msra.mxu0 0.0
  %1551 = vmatprep.subr.mxu0 0.0
  %1552 = vmatpush1.xpose.msra.mxu0 0.0
  %1553 = vmatprep.subr.mxu0 0.0
  %1554 = vmatpush1.xpose.msra.mxu0 0.0
  %1555 = vmatprep.subr.mxu0 0.0
  %1556 = vmatpush1.xpose.msra.mxu0 0.0
  %1557 = vmatprep.subr.mxu0 0.0
  %1558 = vmatpush1.xpose.msra.mxu0 0.0
  %1559 = vmatprep.subr.mxu0 0.0
  %1560 = vmatpush1.xpose.msra.mxu0 0.0
  %1561 = vmatprep.subr.mxu0 0.0
  %1562 = vmatpush1.xpose.msra.mxu0 0.0
  %1563 = vmatprep.subr.mxu0 0.0
  %1564 = vmatpush1.xpose.msra.mxu0 0.0
  %1565 = vmatprep.subr.mxu0 0.0
  %1566 = vmatpush1.xpose.msra.mxu0 0.0
  %1567 = vmatprep.subr.mxu0 0.0
  %1568 = vmatpush1.xpose.msra.mxu0 0.0
  %1569 = vmatprep.subr.mxu0 0.0
  %1570 = vmatpush1.xpose.msra.mxu0 0.0
  %1571 = vmatprep.mubr.f32.mxu0 0.0
  %1572 = vmatmul.mubr.f32.gmra.mrb[0].mxu0 %v1499
  %v1573 = vpop.f32.mrb[0].mxu0
  %v1574 = vadd.f32 0.0, %v1573
  %v1575 = vpop.f32.mrb[0].mxu0
  %1576 = vdwg.mxu0
  %1577 = vrot.lane.b32.xlu0 %v283, 112
  %v1578 = vpop.permute.xlu0 %1577
  %v1579 = vsel %vm45, %v1578, 0
  %v1582 = vsel %vm45, %v1175, 0
  %v1585 = vsel %vm45, %v1176, 0
  %1587 = vmatprep.subr.mxu0 0.0
  %1588 = vmatpush1.xpose.msra.mxu0 %v1582
  %1589 = vmatprep.subr.mxu0 0.0
  %1590 = vmatpush1.xpose.msra.mxu0 %v1585
  %1591 = vmatprep.subr.mxu0 0.0
  %1592 = vmatpush1.xpose.msra.mxu0 0.0
  %1593 = vmatprep.subr.mxu0 0.0
  %1594 = vmatpush1.xpose.msra.mxu0 0.0
  %1595 = vmatprep.subr.mxu0 0.0
  %1596 = vmatpush1.xpose.msra.mxu0 0.0
  %1597 = vmatprep.subr.mxu0 0.0
  %1598 = vmatpush1.xpose.msra.mxu0 0.0
  %1599 = vmatprep.subr.mxu0 0.0
  %1600 = vmatpush1.xpose.msra.mxu0 0.0
  %1601 = vmatprep.subr.mxu0 0.0
  %1602 = vmatpush1.xpose.msra.mxu0 0.0
  %1603 = vmatprep.subr.mxu0 0.0
  %1604 = vmatpush1.xpose.msra.mxu0 0.0
  %1605 = vmatprep.subr.mxu0 0.0
  %1606 = vmatpush1.xpose.msra.mxu0 0.0
  %1607 = vmatprep.subr.mxu0 0.0
  %1608 = vmatpush1.xpose.msra.mxu0 0.0
  %1609 = vmatprep.subr.mxu0 0.0
  %1610 = vmatpush1.xpose.msra.mxu0 0.0
  %1611 = vmatprep.subr.mxu0 0.0
  %1612 = vmatpush1.xpose.msra.mxu0 0.0
  %1613 = vmatprep.subr.mxu0 0.0
  %1614 = vmatpush1.xpose.msra.mxu0 0.0
  %1615 = vmatprep.subr.mxu0 0.0
  %1616 = vmatpush1.xpose.msra.mxu0 0.0
  %1617 = vmatprep.subr.mxu0 0.0
  %1618 = vmatpush1.xpose.msra.mxu0 0.0
  %1619 = vmatprep.subr.mxu0 0.0
  %1620 = vmatpush1.xpose.msra.mxu0 0.0
  %1621 = vmatprep.subr.mxu0 0.0
  %1622 = vmatpush1.xpose.msra.mxu0 0.0
  %1623 = vmatprep.subr.mxu0 0.0
  %1624 = vmatpush1.xpose.msra.mxu0 0.0
  %1625 = vmatprep.subr.mxu0 0.0
  %1626 = vmatpush1.xpose.msra.mxu0 0.0
  %1627 = vmatprep.subr.mxu0 0.0
  %1628 = vmatpush1.xpose.msra.mxu0 0.0
  %1629 = vmatprep.subr.mxu0 0.0
  %1630 = vmatpush1.xpose.msra.mxu0 0.0
  %1631 = vmatprep.subr.mxu0 0.0
  %1632 = vmatpush1.xpose.msra.mxu0 0.0
  %1633 = vmatprep.subr.mxu0 0.0
  %1634 = vmatpush1.xpose.msra.mxu0 0.0
  %1635 = vmatprep.subr.mxu0 0.0
  %1636 = vmatpush1.xpose.msra.mxu0 0.0
  %1637 = vmatprep.subr.mxu0 0.0
  %1638 = vmatpush1.xpose.msra.mxu0 0.0
  %1639 = vmatprep.subr.mxu0 0.0
  %1640 = vmatpush1.xpose.msra.mxu0 0.0
  %1641 = vmatprep.subr.mxu0 0.0
  %1642 = vmatpush1.xpose.msra.mxu0 0.0
  %1643 = vmatprep.subr.mxu0 0.0
  %1644 = vmatpush1.xpose.msra.mxu0 0.0
  %1645 = vmatprep.subr.mxu0 0.0
  %1646 = vmatpush1.xpose.msra.mxu0 0.0
  %1647 = vmatprep.subr.mxu0 0.0
  %1648 = vmatpush1.xpose.msra.mxu0 0.0
  %1649 = vmatprep.subr.mxu0 0.0
  %1650 = vmatpush1.xpose.msra.mxu0 0.0
  %1651 = vmatprep.mubr.f32.mxu0 0.0
  %1652 = vmatmul.mubr.f32.gmra.mrb[0].mxu0 %v1579
  %v1653 = vpop.f32.mrb[0].mxu0
  %v1654 = vadd.f32 0.0, %v1653
  %v1655 = vpop.f32.mrb[0].mxu0
  %1656 = vdwg.mxu0
  %1657 = vrot.lane.b32.xlu0 %v288, 112
  %v1658 = vpop.permute.xlu0 %1657
  %v1659 = vsel %vm45, %v1658, 0
  %v1662 = vsel %vm45, %v1177, 0
  %v1665 = vsel %vm45, %v1178, 0
  %1667 = vmatprep.subr.mxu0 0.0
  %1668 = vmatpush1.xpose.msra.mxu0 %v1662
  %1669 = vmatprep.subr.mxu0 0.0
  %1670 = vmatpush1.xpose.msra.mxu0 %v1665
  %1671 = vmatprep.subr.mxu0 0.0
  %1672 = vmatpush1.xpose.msra.mxu0 0.0
  %1673 = vmatprep.subr.mxu0 0.0
  %1674 = vmatpush1.xpose.msra.mxu0 0.0
  %1675 = vmatprep.subr.mxu0 0.0
  %1676 = vmatpush1.xpose.msra.mxu0 0.0
  %1677 = vmatprep.subr.mxu0 0.0
  %1678 = vmatpush1.xpose.msra.mxu0 0.0
  %1679 = vmatprep.subr.mxu0 0.0
  %1680 = vmatpush1.xpose.msra.mxu0 0.0
  %1681 = vmatprep.subr.mxu0 0.0
  %1682 = vmatpush1.xpose.msra.mxu0 0.0
  %1683 = vmatprep.subr.mxu0 0.0
  %1684 = vmatpush1.xpose.msra.mxu0 0.0
  %1685 = vmatprep.subr.mxu0 0.0
  %1686 = vmatpush1.xpose.msra.mxu0 0.0
  %1687 = vmatprep.subr.mxu0 0.0
  %1688 = vmatpush1.xpose.msra.mxu0 0.0
  %1689 = vmatprep.subr.mxu0 0.0
  %1690 = vmatpush1.xpose.msra.mxu0 0.0
  %1691 = vmatprep.subr.mxu0 0.0
  %1692 = vmatpush1.xpose.msra.mxu0 0.0
  %1693 = vmatprep.subr.mxu0 0.0
  %1694 = vmatpush1.xpose.msra.mxu0 0.0
  %1695 = vmatprep.subr.mxu0 0.0
  %1696 = vmatpush1.xpose.msra.mxu0 0.0
  %1697 = vmatprep.subr.mxu0 0.0
  %1698 = vmatpush1.xpose.msra.mxu0 0.0
  %1699 = vmatprep.subr.mxu0 0.0
  %1700 = vmatpush1.xpose.msra.mxu0 0.0
  %1701 = vmatprep.subr.mxu0 0.0
  %1702 = vmatpush1.xpose.msra.mxu0 0.0
  %1703 = vmatprep.subr.mxu0 0.0
  %1704 = vmatpush1.xpose.msra.mxu0 0.0
  %1705 = vmatprep.subr.mxu0 0.0
  %1706 = vmatpush1.xpose.msra.mxu0 0.0
  %1707 = vmatprep.subr.mxu0 0.0
  %1708 = vmatpush1.xpose.msra.mxu0 0.0
  %1709 = vmatprep.subr.mxu0 0.0
  %1710 = vmatpush1.xpose.msra.mxu0 0.0
  %1711 = vmatprep.subr.mxu0 0.0
  %1712 = vmatpush1.xpose.msra.mxu0 0.0
  %1713 = vmatprep.subr.mxu0 0.0
  %1714 = vmatpush1.xpose.msra.mxu0 0.0
  %1715 = vmatprep.subr.mxu0 0.0
  %1716 = vmatpush1.xpose.msra.mxu0 0.0
  %1717 = vmatprep.subr.mxu0 0.0
  %1718 = vmatpush1.xpose.msra.mxu0 0.0
  %1719 = vmatprep.subr.mxu0 0.0
  %1720 = vmatpush1.xpose.msra.mxu0 0.0
  %1721 = vmatprep.subr.mxu0 0.0
  %1722 = vmatpush1.xpose.msra.mxu0 0.0
  %1723 = vmatprep.subr.mxu0 0.0
  %1724 = vmatpush1.xpose.msra.mxu0 0.0
  %1725 = vmatprep.subr.mxu0 0.0
  %1726 = vmatpush1.xpose.msra.mxu0 0.0
  %1727 = vmatprep.subr.mxu0 0.0
  %1728 = vmatpush1.xpose.msra.mxu0 0.0
  %1729 = vmatprep.subr.mxu0 0.0
  %1730 = vmatpush1.xpose.msra.mxu0 0.0
  %1731 = vmatprep.mubr.f32.mxu0 0.0
  %1732 = vmatmul.mubr.f32.gmra.mrb[0].mxu0 %v1659
  %v1733 = vpop.f32.mrb[0].mxu0
  %v1734 = vadd.f32 0.0, %v1733
  %v1735 = vpop.f32.mrb[0].mxu0
  %1736 = vdwg.mxu0
  %1737 = vrot.lane.b32.xlu0 %v293, 112
  %v1738 = vpop.permute.xlu0 %1737
  %v1739 = vsel %vm45, %v1738, 0
  %v1742 = vsel %vm45, %v1179, 0
  %v1745 = vsel %vm45, %v1180, 0
  %1747 = vmatprep.subr.mxu0 0.0
  %1748 = vmatpush1.xpose.msra.mxu0 %v1742
  %1749 = vmatprep.subr.mxu0 0.0
  %1750 = vmatpush1.xpose.msra.mxu0 %v1745
  %1751 = vmatprep.subr.mxu0 0.0
  %1752 = vmatpush1.xpose.msra.mxu0 0.0
  %1753 = vmatprep.subr.mxu0 0.0
  %1754 = vmatpush1.xpose.msra.mxu0 0.0
  %1755 = vmatprep.subr.mxu0 0.0
  %1756 = vmatpush1.xpose.msra.mxu0 0.0
  %1757 = vmatprep.subr.mxu0 0.0
  %1758 = vmatpush1.xpose.msra.mxu0 0.0
  %1759 = vmatprep.subr.mxu0 0.0
  %1760 = vmatpush1.xpose.msra.mxu0 0.0
  %1761 = vmatprep.subr.mxu0 0.0
  %1762 = vmatpush1.xpose.msra.mxu0 0.0
  %1763 = vmatprep.subr.mxu0 0.0
  %1764 = vmatpush1.xpose.msra.mxu0 0.0
  %1765 = vmatprep.subr.mxu0 0.0
  %1766 = vmatpush1.xpose.msra.mxu0 0.0
  %1767 = vmatprep.subr.mxu0 0.0
  %1768 = vmatpush1.xpose.msra.mxu0 0.0
  %1769 = vmatprep.subr.mxu0 0.0
  %1770 = vmatpush1.xpose.msra.mxu0 0.0
  %1771 = vmatprep.subr.mxu0 0.0
  %1772 = vmatpush1.xpose.msra.mxu0 0.0
  %1773 = vmatprep.subr.mxu0 0.0
  %1774 = vmatpush1.xpose.msra.mxu0 0.0
  %1775 = vmatprep.subr.mxu0 0.0
  %1776 = vmatpush1.xpose.msra.mxu0 0.0
  %1777 = vmatprep.subr.mxu0 0.0
  %1778 = vmatpush1.xpose.msra.mxu0 0.0
  %1779 = vmatprep.subr.mxu0 0.0
  %1780 = vmatpush1.xpose.msra.mxu0 0.0
  %1781 = vmatprep.subr.mxu0 0.0
  %1782 = vmatpush1.xpose.msra.mxu0 0.0
  %1783 = vmatprep.subr.mxu0 0.0
  %1784 = vmatpush1.xpose.msra.mxu0 0.0
  %1785 = vmatprep.subr.mxu0 0.0
  %1786 = vmatpush1.xpose.msra.mxu0 0.0
  %1787 = vmatprep.subr.mxu0 0.0
  %1788 = vmatpush1.xpose.msra.mxu0 0.0
  %1789 = vmatprep.subr.mxu0 0.0
  %1790 = vmatpush1.xpose.msra.mxu0 0.0
  %1791 = vmatprep.subr.mxu0 0.0
  %1792 = vmatpush1.xpose.msra.mxu0 0.0
  %1793 = vmatprep.subr.mxu0 0.0
  %1794 = vmatpush1.xpose.msra.mxu0 0.0
  %1795 = vmatprep.subr.mxu0 0.0
  %1796 = vmatpush1.xpose.msra.mxu0 0.0
  %1797 = vmatprep.subr.mxu0 0.0
  %1798 = vmatpush1.xpose.msra.mxu0 0.0
  %1799 = vmatprep.subr.mxu0 0.0
  %1800 = vmatpush1.xpose.msra.mxu0 0.0
  %1801 = vmatprep.subr.mxu0 0.0
  %1802 = vmatpush1.xpose.msra.mxu0 0.0
  %1803 = vmatprep.subr.mxu0 0.0
  %1804 = vmatpush1.xpose.msra.mxu0 0.0
  %1805 = vmatprep.subr.mxu0 0.0
  %1806 = vmatpush1.xpose.msra.mxu0 0.0
  %1807 = vmatprep.subr.mxu0 0.0
  %1808 = vmatpush1.xpose.msra.mxu0 0.0
  %1809 = vmatprep.subr.mxu0 0.0
  %1810 = vmatpush1.xpose.msra.mxu0 0.0
  %1811 = vmatprep.mubr.f32.mxu0 0.0
  %1812 = vmatmul.mubr.f32.gmra.mrb[0].mxu0 %v1739
  %v1813 = vpop.f32.mrb[0].mxu0
  %v1814 = vadd.f32 0.0, %v1813
  %v1815 = vpop.f32.mrb[0].mxu0
  %1816 = vdwg.mxu0
  %1821 = vrot.lane.b32.xlu0 %v1574, 16
  %v1822 = vpop.permute.xlu0 %1821
  %1823 = vrot.lane.b32.xlu0 %v1654, 16
  %v1824 = vpop.permute.xlu0 %1823
  %1825 = vrot.lane.b32.xlu0 %v1734, 16
  %v1826 = vpop.permute.xlu0 %1825
  %1827 = vrot.lane.b32.xlu0 %v1814, 16
  %v1828 = vpop.permute.xlu0 %1827
  %v1833 = vsel %vm45, %v1257, %v1822
  %v1834 = vsel %vm45, %v1336, %v1824
  %v1835 = vsel %vm45, %v1415, %v1826
  %v1836 = vsel %vm45, %v1494, %v1828
  %v1837 = vld [vmem:[%s3] sm:$0xff]
  %v1838 = vld [vmem:[%s3 + $0x8] sm:$0xff]
  %v1839 = vld [vmem:[%s3 + $0x10] sm:$0xff]
  %v1840 = vld [vmem:[%s3 + $0x18] sm:$0xff]
  %v1841 = vld [vmem:[%s4] sm:$0xff]
  %v1842 = vld [vmem:[%s4 + $0x8] sm:$0xff]
  %v1843 = vld [vmem:[%s4 + $0x10] sm:$0xff]
  %v1844 = vld [vmem:[%s4 + $0x18] sm:$0xff]
  %1846 = vset.pattern.permute.xlu0 0
  %1847 = vperm.xlu0 %1846, %v1841
  %v1848 = vpop.permute.xlu0 %1847
  %1851 = vset.pattern.permute.xlu0 0
  %1852 = vperm.xlu0 %1851, %v1842
  %v1853 = vpop.permute.xlu0 %1852
  %1856 = vset.pattern.permute.xlu0 0
  %1857 = vperm.xlu0 %1856, %v1843
  %v1858 = vpop.permute.xlu0 %1857
  %1861 = vset.pattern.permute.xlu0 0
  %1862 = vperm.xlu0 %1861, %v1844
  %v1863 = vpop.permute.xlu0 %1862
  %v1866 = vsel %vm134, %v1837, 0
  %v1869 = vsel %vm134, %v1838, 0
  %v1872 = vsel %vm134, %v1839, 0
  %v1875 = vsel %vm134, %v1840, 0
  %1877 = vmatprep.subr.mxu0 0.0
  %1878 = vmatpush1.msra.mxu0 %v1833
  %1879 = vmatprep.subr.mxu0 0.0
  %1880 = vmatpush1.msra.mxu0 %v1834
  %1881 = vmatprep.subr.mxu0 0.0
  %1882 = vmatpush1.msra.mxu0 %v1835
  %1883 = vmatprep.subr.mxu0 0.0
  %1884 = vmatpush1.msra.mxu0 %v1836
  %1885 = vmatprep.subr.mxu0 0.0
  %1886 = vmatpush1.msra.mxu0 0.0
  %1887 = vmatprep.subr.mxu0 0.0
  %1888 = vmatpush1.msra.mxu0 0.0
  %1889 = vmatprep.subr.mxu0 0.0
  %1890 = vmatpush1.msra.mxu0 0.0
  %1891 = vmatprep.subr.mxu0 0.0
  %1892 = vmatpush1.msra.mxu0 0.0
  %1893 = vmatprep.subr.mxu0 0.0
  %1894 = vmatpush1.msra.mxu0 0.0
  %1895 = vmatprep.subr.mxu0 0.0
  %1896 = vmatpush1.msra.mxu0 0.0
  %1897 = vmatprep.subr.mxu0 0.0
  %1898 = vmatpush1.msra.mxu0 0.0
  %1899 = vmatprep.subr.mxu0 0.0
  %1900 = vmatpush1.msra.mxu0 0.0
  %1901 = vmatprep.subr.mxu0 0.0
  %1902 = vmatpush1.msra.mxu0 0.0
  %1903 = vmatprep.subr.mxu0 0.0
  %1904 = vmatpush1.msra.mxu0 0.0
  %1905 = vmatprep.subr.mxu0 0.0
  %1906 = vmatpush1.msra.mxu0 0.0
  %1907 = vmatprep.subr.mxu0 0.0
  %1908 = vmatpush1.msra.mxu0 0.0
  %1909 = vmatprep.subr.mxu0 0.0
  %1910 = vmatpush1.msra.mxu0 0.0
  %1911 = vmatprep.subr.mxu0 0.0
  %1912 = vmatpush1.msra.mxu0 0.0
  %1913 = vmatprep.subr.mxu0 0.0
  %1914 = vmatpush1.msra.mxu0 0.0
  %1915 = vmatprep.subr.mxu0 0.0
  %1916 = vmatpush1.msra.mxu0 0.0
  %1917 = vmatprep.subr.mxu0 0.0
  %1918 = vmatpush1.msra.mxu0 0.0
  %1919 = vmatprep.subr.mxu0 0.0
  %1920 = vmatpush1.msra.mxu0 0.0
  %1921 = vmatprep.subr.mxu0 0.0
  %1922 = vmatpush1.msra.mxu0 0.0
  %1923 = vmatprep.subr.mxu0 0.0
  %1924 = vmatpush1.msra.mxu0 0.0
  %1925 = vmatprep.subr.mxu0 0.0
  %1926 = vmatpush1.msra.mxu0 0.0
  %1927 = vmatprep.subr.mxu0 0.0
  %1928 = vmatpush1.msra.mxu0 0.0
  %1929 = vmatprep.subr.mxu0 0.0
  %1930 = vmatpush1.msra.mxu0 0.0
  %1931 = vmatprep.subr.mxu0 0.0
  %1932 = vmatpush1.msra.mxu0 0.0
  %1933 = vmatprep.subr.mxu0 0.0
  %1934 = vmatpush1.msra.mxu0 0.0
  %1935 = vmatprep.subr.mxu0 0.0
  %1936 = vmatpush1.msra.mxu0 0.0
  %1937 = vmatprep.subr.mxu0 0.0
  %1938 = vmatpush1.msra.mxu0 0.0
  %1939 = vmatprep.subr.mxu0 0.0
  %1940 = vmatpush1.msra.mxu0 0.0
  %1941 = vmatprep.mubr.f32.mxu0 0.0
  %1942 = vmatmul.mubr.f32.gmra.mrb[0].mxu0 %v1866
  %v1943 = vpop.f32.mrb[0].mxu0
  %v1944 = vadd.f32 %v1848, %v1943
  %v1945 = vpop.f32.mrb[0].mxu0
  %1946 = vmatprep.mubr.f32.mxu0 0.0
  %1947 = vmatmul.mubr.f32.gmra.mrb[0].mxu0 %v1869
  %v1948 = vpop.f32.mrb[0].mxu0
  %v1949 = vadd.f32 %v1853, %v1948
  %v1950 = vpop.f32.mrb[0].mxu0
  %1951 = vmatprep.mubr.f32.mxu0 0.0
  %1952 = vmatmul.mubr.f32.gmra.mrb[0].mxu0 %v1872
  %v1953 = vpop.f32.mrb[0].mxu0
  %v1954 = vadd.f32 %v1858, %v1953
  %v1955 = vpop.f32.mrb[0].mxu0
  %1956 = vmatprep.mubr.f32.mxu0 0.0
  %1957 = vmatmul.mubr.f32.gmra.mrb[0].mxu0 %v1875
  %v1958 = vpop.f32.mrb[0].mxu0
  %v1959 = vadd.f32 %v1863, %v1958
  %v1960 = vpop.f32.mrb[0].mxu0
  %1961 = vdwg.mxu0
  %1962 = vst.msk [vmem:[%s5] sm:$0xff] %vm45, %v1944
  %1963 = vst.msk [vmem:[%s5 + $0x8] sm:$0xff] %vm45, %v1949
  %1964 = vst.msk [vmem:[%s5 + $0x10] sm:$0xff] %vm45, %v1954
  %1965 = vst.msk [vmem:[%s5 + $0x18] sm:$0xff] %vm45, %v1959
  %1970 = vrot.lane.b32.xlu0 %v1944, 112
  %v1971 = vpop.permute.xlu0 %1970
  %1972 = vrot.lane.b32.xlu0 %v1949, 112
  %v1973 = vpop.permute.xlu0 %1972
  %1974 = vrot.lane.b32.xlu0 %v1954, 112
  %v1975 = vpop.permute.xlu0 %1974
  %1976 = vrot.lane.b32.xlu0 %v1959, 112
  %v1977 = vpop.permute.xlu0 %1976
  %s1982 = scalar_lea.vmem %s5, 32
  %1983 = vst.msk [vmem:[%s1982] sm:$0xff] %vm45, %v1971
  %1984 = vst.msk [vmem:[%s1982 + $0x8] sm:$0xff] %vm45, %v1973
  %1985 = vst.msk [vmem:[%s1982 + $0x10] sm:$0xff] %vm45, %v1975
  %1986 = vst.msk [vmem:[%s1982 + $0x18] sm:$0xff] %vm45, %v1977
  // Predicated region
  $region22: #{tpu_custom_call.1} parent=0 // pred_check
    _
  $region23: #{tpu_custom_call.1} parent=0 // pred_check_branch
    %1988 = sbr.rel (0) target = $region25
  $region24: #{tpu_custom_call.1} parent=0 // pred_region
    _
  $region25: #{tpu_custom_call.1} parent=0 // pred_fallthru
    _
  // Predicated region
  $region26: #{tpu_custom_call.1} parent=0 // pred_check
    _
  $region27: #{tpu_custom_call.1} parent=0 // pred_check_branch
    %1990 = sbr.rel (0) target = $region29
  $region28: #{tpu_custom_call.1} parent=0 // pred_region
    _
  $region29: #{tpu_custom_call.1} parent=0 // pred_fallthru
    _

</llo_original>
